<compile_context>
chip_gen: v7x
topology: tpu7x:2x2x1
jax: 0.10.0
libtpu: 0.0.40
codegen_flags: <defaults>
</compile_context>

<pallas_src>
import functools

import jax
import jax.numpy as jnp
from jax.experimental import pallas as pl
from jax.experimental.pallas import tpu as pltpu

# MountainCarContinuous-v0: observation dim = 2, action dim = 1
N_STATES = 2
N_ACTIONS = 1
HIDDEN = 32
MAX_ACTIONS = 1.0
LANE = 128                    # TPU lane width; lane-dense everywhere
PACK_ROWS = HIDDEN + 8        # 40: rows 0..31 weights, row 32 bias, 33..39 pad

assert N_ACTIONS == 1, "VPU reduce path in layer 4 assumes a single action head"
assert N_STATES <= HIDDEN <= LANE


def _actor_kernel(x_ref, wb_ref, out_ref):
    """x_ref: (TB, N_STATES); wb_ref: (4, PACK_ROWS, 128); out_ref: (TB, 128)."""
    x = x_ref[...]                                          # (TB, n_states) tiny tile

    # ---- Layer 1: K=2 degenerate dot -> VPU broadcast-FMAs (no MXU round-trip)
    h = wb_ref[0, HIDDEN:HIDDEN + 1, :]                     # bias row (1, 128)
    for s in range(N_STATES):                               # static unroll (N_STATES = 2)
        h = h + x[:, s:s + 1] * wb_ref[0, s:s + 1, :]
    h = jnp.maximum(h, 0.0)                                 # (TB, 128); lanes >= 32 stay 0

    # ---- Layers 2 & 3: 32xK dots (K=HIDDEN), zero-padded output lanes -> MXU
    h = jnp.maximum(
        jnp.dot(h[:, :HIDDEN], wb_ref[1, :HIDDEN, :],
                preferred_element_type=jnp.float32,
                precision=jax.lax.Precision.HIGHEST)
        + wb_ref[1, HIDDEN:HIDDEN + 1, :], 0.0)
    h = jnp.maximum(
        jnp.dot(h[:, :HIDDEN], wb_ref[2, :HIDDEN, :],
                preferred_element_type=jnp.float32,
                precision=jax.lax.Precision.HIGHEST)
        + wb_ref[2, HIDDEN:HIDDEN + 1, :], 0.0)

    # ---- Layer 4: N=1 degenerate dot -> VPU multiply + lane reduction (XLU)
    y = jnp.sum(h * wb_ref[3, 0:1, :], axis=-1, keepdims=True)        # (TB, 1)
    # row HIDDEN of pack 3 carries b4 replicated across all lanes -> lane-dense store
    out_ref[...] = (jnp.tanh(y + wb_ref[3, HIDDEN:HIDDEN + 1, :])
                    * MAX_ACTIONS).astype(out_ref.dtype)


def pack_params(p):
    """Pack all 8 small params into ONE (4, 40, 128) lane-dense buffer (do ONCE)."""
    wb = jnp.zeros((4, PACK_ROWS, LANE), jnp.float32)
    wb = wb.at[0, :N_STATES, :HIDDEN].set(p["w1"])          # rows used by VPU FMAs
    wb = wb.at[0, HIDDEN, :HIDDEN].set(p["b1"][0])
    wb = wb.at[1, :HIDDEN, :HIDDEN].set(p["w2"])            # MXU
    wb = wb.at[1, HIDDEN, :HIDDEN].set(p["b2"][0])
    wb = wb.at[2, :HIDDEN, :HIDDEN].set(p["w3"])            # MXU
    wb = wb.at[2, HIDDEN, :HIDDEN].set(p["b3"][0])
    wb = wb.at[3, 0, :HIDDEN].set(p["w4"][:, 0])            # W4^T row for lane reduce
    wb = wb.at[3, HIDDEN, :].set(p["b4"][0, 0])             # b4 replicated on all lanes
    return wb


def _round_up(n, m):
    return ((n + m - 1) // m) * m


def actor_forward(x, wb_packed, *, tile_b=256):
    """x: (B, n_states) f32; wb_packed: (4, 40, 128) f32. Returns (B, n_actions)."""
    bsz = x.shape[0]
    tb = _round_up(min(tile_b, _round_up(bsz, 8)), 8)       # batch tile, multiple of 8
    bp = _round_up(bsz, tb)
    if bp != bsz:
        x = jnp.pad(x, ((0, bp - bsz), (0, 0)))
    grid = (bp // tb,)

    out = pl.pallas_call(
        _actor_kernel,
        out_shape=jax.ShapeDtypeStruct((bp, LANE), jnp.float32),
        grid=grid,
        in_specs=[
            pl.BlockSpec((tb, N_STATES), lambda i: (i, 0)),
            # constant block index -> weights stay VMEM-resident across grid steps
            pl.BlockSpec((4, PACK_ROWS, LANE), lambda i: (0, 0, 0)),
        ],
        out_specs=pl.BlockSpec((tb, LANE), lambda i: (i, 0)),
        compiler_params=pltpu.CompilerParams(
            dimension_semantics=("parallel",)),              # shards across v7x's 2 TCs
    )(x, wb_packed)
    return out[:bsz, :N_ACTIONS]


def init_params(key):
    """Deterministic init mimicking torch.nn.Linear default (U[-1/sqrt(fan_in), +])."""
    def linear(k, fan_in, fan_out):
        kw, kb = jax.random.split(k)
        bound = 1.0 / jnp.sqrt(fan_in)
        w = jax.random.uniform(kw, (fan_in, fan_out), jnp.float32, -bound, bound)
        b = jax.random.uniform(kb, (1, fan_out), jnp.float32, -bound, bound)
        return w, b

    k1, k2, k3, k4 = jax.random.split(key, 4)
    w1, b1 = linear(k1, N_STATES, HIDDEN)
    w2, b2 = linear(k2, HIDDEN, HIDDEN)
    w3, b3 = linear(k3, HIDDEN, HIDDEN)
    w4, b4 = linear(k4, HIDDEN, N_ACTIONS)
    return {"w1": w1, "b1": b1, "w2": w2, "b2": b2,
            "w3": w3, "b3": b3, "w4": w4, "b4": b4}


def actor_forward_ref(x, p):
    """Pure-JAX reference for verification."""
    h = jnp.maximum(x @ p["w1"] + p["b1"], 0.0)
    h = jnp.maximum(h @ p["w2"] + p["b2"], 0.0)
    h = jnp.maximum(h @ p["w3"] + p["b3"], 0.0)
    return jnp.tanh(h @ p["w4"] + p["b4"]) * MAX_ACTIONS


if __name__ == "__main__":
    key = jax.random.PRNGKey(0)
    k_params, k_x = jax.random.split(key)

    params = init_params(k_params)
    wb_packed = pack_params(params)              # one-time host-side packing

    batch = 256                                  # vectorized-env style batch
    x = jax.random.normal(k_x, (batch, N_STATES), jnp.float32)

    # Jit the wrapper so dispatch + packing overhead is paid once per rollout step.
    actor = jax.jit(functools.partial(actor_forward, tile_b=128))  # grid of 2 tiles

    out = actor(x, wb_packed)
    out = jax.block_until_ready(out)

    ref = actor_forward_ref(x, params)
    assert out.shape == (batch, N_ACTIONS)
    assert jnp.allclose(out, ref, atol=1e-5, rtol=1e-5), "mismatch vs reference"

    # Also check a tiny, non-multiple-of-tile batch to exercise the padding path.
    x_small = x[:5]
    out_small = jax.block_until_ready(actor_forward(x_small, wb_packed))
    assert out_small.shape == (5, N_ACTIONS)
    assert jnp.allclose(out_small, ref[:5], atol=1e-5, rtol=1e-5), "small-batch mismatch"

    print("KERNEL_OK")
</pallas_src>

<mosaic_0001>
module attributes {stable_mosaic.version = 11 : i64} {
  func.func @_actor_kernel(%arg0: i32, %arg1: memref<128x2xf32, #tpu.memory_space<vmem>>, %arg2: memref<4x40x128xf32, #tpu.memory_space<vmem>>, %arg3: memref<128x128xf32, #tpu.memory_space<vmem>>) attributes {dimension_semantics = [#tpu.dimension_semantics<parallel>], iteration_bounds = array<i64: 2>, scalar_prefetch = 0 : i64, scratch_operands = 0 : i64, tpu.core_type = #tpu.core_type<tc>, window_params = [{transform_indices = @transform_0, window_bounds = array<i64: 128, 2>}, {pipeline_mode = #tpu.pipeline_mode<synchronous>, transform_indices = @transform_1, window_bounds = array<i64: 4, 40, 128>}, {transform_indices = @transform_2, window_bounds = array<i64: 128, 128>}]} {
    %c0 = arith.constant 0 : index
    %c0_0 = arith.constant 0 : index
    %0 = vector.load %arg1[%c0, %c0_0] : memref<128x2xf32, #tpu.memory_space<vmem>>, vector<128x2xf32>
    %c0_1 = arith.constant 0 : index
    %c32 = arith.constant 32 : index
    %c0_2 = arith.constant 0 : index
    %1 = vector.load %arg2[%c0_1, %c32, %c0_2] : memref<4x40x128xf32, #tpu.memory_space<vmem>>, vector<1x1x128xf32>
    %2 = vector.shape_cast %1 : vector<1x1x128xf32> to vector<1x128xf32>
    %3 = vector.extract_strided_slice %0 {offsets = [0, 0], sizes = [128, 1], strides = [1, 1]} : vector<128x2xf32> to vector<128x1xf32>
    %c0_3 = arith.constant 0 : index
    %c0_4 = arith.constant 0 : index
    %c0_5 = arith.constant 0 : index
    %4 = vector.load %arg2[%c0_3, %c0_4, %c0_5] : memref<4x40x128xf32, #tpu.memory_space<vmem>>, vector<1x1x128xf32>
    %5 = vector.shape_cast %4 : vector<1x1x128xf32> to vector<1x128xf32>
    %6 = vector.broadcast %3 : vector<128x1xf32> to vector<128x128xf32>
    %7 = vector.broadcast %5 : vector<1x128xf32> to vector<128x128xf32>
    %8 = arith.mulf %6, %7 : vector<128x128xf32>
    %9 = vector.broadcast %2 : vector<1x128xf32> to vector<128x128xf32>
    %10 = arith.addf %9, %8 : vector<128x128xf32>
    %11 = vector.extract_strided_slice %0 {offsets = [0, 1], sizes = [128, 1], strides = [1, 1]} : vector<128x2xf32> to vector<128x1xf32>
    %c0_6 = arith.constant 0 : index
    %c1 = arith.constant 1 : index
    %c0_7 = arith.constant 0 : index
    %12 = vector.load %arg2[%c0_6, %c1, %c0_7] : memref<4x40x128xf32, #tpu.memory_space<vmem>>, vector<1x1x128xf32>
    %13 = vector.shape_cast %12 : vector<1x1x128xf32> to vector<1x128xf32>
    %14 = vector.broadcast %11 : vector<128x1xf32> to vector<128x128xf32>
    %15 = vector.broadcast %13 : vector<1x128xf32> to vector<128x128xf32>
    %16 = arith.mulf %14, %15 : vector<128x128xf32>
    %17 = arith.addf %10, %16 : vector<128x128xf32>
    %cst = arith.constant 0.000000e+00 : f32
    %18 = vector.broadcast %cst : f32 to vector<128x128xf32>
    %19 = arith.maximumf %17, %18 : vector<128x128xf32>
    %20 = vector.extract_strided_slice %19 {offsets = [0, 0], sizes = [128, 32], strides = [1, 1]} : vector<128x128xf32> to vector<128x32xf32>
    %c1_8 = arith.constant 1 : index
    %c0_9 = arith.constant 0 : index
    %c0_10 = arith.constant 0 : index
    %21 = vector.load %arg2[%c1_8, %c0_9, %c0_10] : memref<4x40x128xf32, #tpu.memory_space<vmem>>, vector<1x32x128xf32>
    %22 = vector.shape_cast %21 : vector<1x32x128xf32> to vector<32x128xf32>
    %cst_11 = arith.constant dense<0.000000e+00> : vector<128x128xf32>
    %23 = tpu.matmul %20, %22, %cst_11 {dimension_numbers = #tpu.dot_dimension_numbers<[1], [0], [0], [1], [0, 0, 1, 1], [], []>, precision = #tpu.contract_precision<fp32>} : vector<128x32xf32>, vector<32x128xf32>, vector<128x128xf32> -> vector<128x128xf32>
    %c1_12 = arith.constant 1 : index
    %c32_13 = arith.constant 32 : index
    %c0_14 = arith.constant 0 : index
    %24 = vector.load %arg2[%c1_12, %c32_13, %c0_14] : memref<4x40x128xf32, #tpu.memory_space<vmem>>, vector<1x1x128xf32>
    %25 = vector.shape_cast %24 : vector<1x1x128xf32> to vector<1x128xf32>
    %26 = vector.broadcast %25 : vector<1x128xf32> to vector<128x128xf32>
    %27 = arith.addf %23, %26 : vector<128x128xf32>
    %cst_15 = arith.constant 0.000000e+00 : f32
    %28 = vector.broadcast %cst_15 : f32 to vector<128x128xf32>
    %29 = arith.maximumf %27, %28 : vector<128x128xf32>
    %30 = vector.extract_strided_slice %29 {offsets = [0, 0], sizes = [128, 32], strides = [1, 1]} : vector<128x128xf32> to vector<128x32xf32>
    %c2 = arith.constant 2 : index
    %c0_16 = arith.constant 0 : index
    %c0_17 = arith.constant 0 : index
    %31 = vector.load %arg2[%c2, %c0_16, %c0_17] : memref<4x40x128xf32, #tpu.memory_space<vmem>>, vector<1x32x128xf32>
    %32 = vector.shape_cast %31 : vector<1x32x128xf32> to vector<32x128xf32>
    %cst_18 = arith.constant dense<0.000000e+00> : vector<128x128xf32>
    %33 = tpu.matmul %30, %32, %cst_18 {dimension_numbers = #tpu.dot_dimension_numbers<[1], [0], [0], [1], [0, 0, 1, 1], [], []>, precision = #tpu.contract_precision<fp32>} : vector<128x32xf32>, vector<32x128xf32>, vector<128x128xf32> -> vector<128x128xf32>
    %c2_19 = arith.constant 2 : index
    %c32_20 = arith.constant 32 : index
    %c0_21 = arith.constant 0 : index
    %34 = vector.load %arg2[%c2_19, %c32_20, %c0_21] : memref<4x40x128xf32, #tpu.memory_space<vmem>>, vector<1x1x128xf32>
    %35 = vector.shape_cast %34 : vector<1x1x128xf32> to vector<1x128xf32>
    %36 = vector.broadcast %35 : vector<1x128xf32> to vector<128x128xf32>
    %37 = arith.addf %33, %36 : vector<128x128xf32>
    %cst_22 = arith.constant 0.000000e+00 : f32
    %38 = vector.broadcast %cst_22 : f32 to vector<128x128xf32>
    %39 = arith.maximumf %37, %38 : vector<128x128xf32>
    %c3 = arith.constant 3 : index
    %c0_23 = arith.constant 0 : index
    %c0_24 = arith.constant 0 : index
    %40 = vector.load %arg2[%c3, %c0_23, %c0_24] : memref<4x40x128xf32, #tpu.memory_space<vmem>>, vector<1x1x128xf32>
    %41 = vector.shape_cast %40 : vector<1x1x128xf32> to vector<1x128xf32>
    %42 = vector.broadcast %41 : vector<1x128xf32> to vector<128x128xf32>
    %43 = arith.mulf %39, %42 : vector<128x128xf32>
    %cst_25 = arith.constant dense<0.000000e+00> : vector<128xf32>
    %44 = vector.multi_reduction <add>, %43, %cst_25 [1] : vector<128x128xf32> to vector<128xf32>
    %45 = vector.shape_cast %44 : vector<128xf32> to vector<128x1xf32>
    %c3_26 = arith.constant 3 : index
    %c32_27 = arith.constant 32 : index
    %c0_28 = arith.constant 0 : index
    %46 = vector.load %arg2[%c3_26, %c32_27, %c0_28] : memref<4x40x128xf32, #tpu.memory_space<vmem>>, vector<1x1x128xf32>
    %47 = vector.shape_cast %46 : vector<1x1x128xf32> to vector<1x128xf32>
    %48 = vector.broadcast %45 : vector<128x1xf32> to vector<128x128xf32>
    %49 = vector.broadcast %47 : vector<1x128xf32> to vector<128x128xf32>
    %50 = arith.addf %48, %49 : vector<128x128xf32>
    %51 = math.tanh %50 : vector<128x128xf32>
    %cst_29 = arith.constant 1.000000e+00 : f32
    %52 = vector.broadcast %cst_29 : f32 to vector<128x128xf32>
    %53 = arith.mulf %51, %52 : vector<128x128xf32>
    %c0_30 = arith.constant 0 : index
    %c0_31 = arith.constant 0 : index
    %54 = vector.load %arg3[%c0_30, %c0_31] : memref<128x128xf32, #tpu.memory_space<vmem>>, vector<128x128xf32>
    tpu.vector_store %arg3[%c0_30, %c0_31], %53 {strides = array<i32>} : memref<128x128xf32, #tpu.memory_space<vmem>>, vector<128x128xf32>,
    return
  }
  func.func @transform_0(%arg0: i32) -> (i32, i32) {
    %c0_i32 = arith.constant 0 : i32
    %c0_i32_0 = arith.constant 0 : i32
    return %arg0, %c0_i32 : i32, i32
  }
  func.func @transform_1(%arg0: i32) -> (i32, i32, i32) {
    %c0_i32 = arith.constant 0 : i32
    %c0_i32_0 = arith.constant 0 : i32
    %c0_i32_1 = arith.constant 0 : i32
    %c0_i32_2 = arith.constant 0 : i32
    return %c0_i32, %c0_i32_0, %c0_i32_1 : i32, i32, i32
  }
  func.func @transform_2(%arg0: i32) -> (i32, i32) {
    %c0_i32 = arith.constant 0 : i32
    %c0_i32_0 = arith.constant 0 : i32
    return %arg0, %c0_i32 : i32, i32
  }
}

</mosaic_0001>

<llo_original>
// kernel: actor_forward.1
$region0: #{actor_forward.1}
  #allocation0 [shape = 'u32[]', space=smem, size = 0x4, offset = 0x4, fixed_abs, tag = 'smem constant byte address 0x4 - core index']
  #allocation1 [shape = 'u32[144,128]{1,0:T(1,128)}', space=vmem, size = 0x12000, scoped, tag = 'internal scratch']
  %s0 = inlined_call_operand.vmem [shape: f32[256,2], index: 0, kind: input, shape index: {}]
  %s1 = inlined_call_operand.vmem [shape: f32[4,40,128], index: 1, kind: input, shape index: {}]
  %s2 = inlined_call_operand.vmem [shape: f32[256,128], index: 2, kind: output, shape index: {}]
  %s3 = sld [smem:[#allocation0]]
  $region41: #{actor_forward.1} parent=0
    _
  %s5 = ssub.s32 1, %s3
  %s6 = scalar_select 0, %s5, %s3
  loop: start=0, step=1, limit=4
  $region2: #{actor_forward.1} parent=0 // loop_pre_header
    _
  $region3: #{actor_forward.1} parent=0 // loop_header
    %s8 = sphi 0, %s12
    %p9 = scmp.ge.s32.totalorder %s8, 4
    %s18 = sphi 0, %s20
    %s21 = sphi 0, %s18
    %s22 = sphi 0, %s21
    %s38 = sphi 0, %s22
    %s42 = sphi 0, %s42
    %s44 = sphi 0, %s42
    %s45 = sphi 0, %s44
    %s59 = sphi 0, %s45
    %s65 = sphi 0, %s67
    %s68 = sphi 0, %s65
    %s69 = sphi 0, %s68
    %s85 = sphi 0, %s69
  $region4: #{actor_forward.1} parent=0 // loop_header_branch
    %11 = sbr.rel (%p9) target = $region8
  $region5: #{actor_forward.1} parent=0 // loop_body
    %s13 = ssub.s32 %s8, 1
    %s14 = ssub.s32 %s8, 2
    %s15 = sadd.s32 %s8, 1
    %s16 = ssub.s32 %s8, %s15
    %p17 = scmp.eq.s32.totalorder %s16, 0
    %s19 = sadd.s32 %s18, 1
    %s20 = scalar_select %p17, %s18, %s19
    %p23 = pneg %p17
    %p24 = scmp.eq.s32.totalorder %s8, 1
    %p25 = por %p23, %p24
    %p26 = scmp.ne.s32.totalorder %s18, %s21
    %p27 = scmp.eq.s32.totalorder %s8, 0
    %p28 = por %p26, %p27
    %p29 = scmp.ne.s32.totalorder %s18, %s21
    %p30 = scmp.eq.s32.totalorder %s13, 1
    %p31 = por %p29, %p30
    %p32 = scmp.ne.s32.totalorder %s21, %s22
    %p33 = scmp.eq.s32.totalorder %s13, 0
    %p34 = por %p32, %p33
    %p35 = scmp.ne.s32.totalorder %s21, %s22
    %p36 = scmp.eq.s32.totalorder %s14, 1
    %p37 = por %p35, %p36
    %p39 = scmp.ne.s32.totalorder %s22, %s38
    %p40 = scmp.eq.s32.totalorder %s14, 0
    %p41 = por %p39, %p40
    %s43 = sadd.s32 %s42, 1
    %p46 = scmp.eq.s32.totalorder %s8, 1
    %p47 = scmp.ne.s32.totalorder %s42, %s44
    %p48 = scmp.eq.s32.totalorder %s8, 0
    %p49 = por %p47, %p48
    %p50 = scmp.ne.s32.totalorder %s42, %s44
    %p51 = scmp.eq.s32.totalorder %s13, 1
    %p52 = por %p50, %p51
    %p53 = scmp.ne.s32.totalorder %s44, %s45
    %p54 = scmp.eq.s32.totalorder %s13, 0
    %p55 = por %p53, %p54
    %p56 = scmp.ne.s32.totalorder %s44, %s45
    %p57 = scmp.eq.s32.totalorder %s14, 1
    %p58 = por %p56, %p57
    %p60 = scmp.ne.s32.totalorder %s45, %s59
    %p61 = scmp.eq.s32.totalorder %s14, 0
    %p62 = por %p60, %p61
    %s63 = ssub.s32 %s8, %s15
    %p64 = scmp.eq.s32.totalorder %s63, 0
    %s66 = sadd.s32 %s65, 1
    %s67 = scalar_select %p64, %s65, %s66
    %p70 = pneg %p64
    %p71 = scmp.eq.s32.totalorder %s8, 1
    %p72 = por %p70, %p71
    %p73 = scmp.ne.s32.totalorder %s65, %s68
    %p74 = scmp.eq.s32.totalorder %s8, 0
    %p75 = por %p73, %p74
    %p76 = scmp.ne.s32.totalorder %s65, %s68
    %p77 = scmp.eq.s32.totalorder %s13, 1
    %p78 = por %p76, %p77
    %p79 = scmp.ne.s32.totalorder %s68, %s69
    %p80 = scmp.eq.s32.totalorder %s13, 0
    %p81 = por %p79, %p80
    %p82 = scmp.ne.s32.totalorder %s68, %s69
    %p83 = scmp.eq.s32.totalorder %s14, 1
    %p84 = por %p82, %p83
    %p86 = scmp.ne.s32.totalorder %s69, %s85
    %p87 = scmp.eq.s32.totalorder %s14, 0
    %p88 = por %p86, %p87
    %p89 = scmp.le.s32.totalorder 1, %s8
    %p90 = scmp.lt.s32.totalorder %s8, 3
    %p91 = pnand %p89, %p90
    %p92 = pneg %p91
    // Predicated region
    $region9: #{actor_forward.1} parent=5 // pred_check
      _
    $region10: #{actor_forward.1} parent=5 // pred_check_branch
      %94 = sbr.rel (%p91) target = $region12
    $region11: #{actor_forward.1} parent=5 // pred_region
      %s95 = ssub.s32 %s8, 1
      // Predicated region
      $region13: #{actor_forward.1} parent=11 // pred_check
        %p96 = pneg %p55
      $region14: #{actor_forward.1} parent=11 // pred_check_branch
        %98 = sbr.rel (%p96) target = $region16
      $region15: #{actor_forward.1} parent=11 // pred_region
        _
      $region16: #{actor_forward.1} parent=11 // pred_fallthru
        _
    $region12: #{actor_forward.1} parent=5 // pred_fallthru
      _
    %p99 = scmp.lt.s32.totalorder %s8, 2
    // Predicated region
    $region17: #{actor_forward.1} parent=5 // pred_check
      %p100 = pneg %p99
    $region18: #{actor_forward.1} parent=5 // pred_check_branch
      %102 = sbr.rel (%p100) target = $region20
    $region19: #{actor_forward.1} parent=5 // pred_region
      // Predicated region
      $region21: #{actor_forward.1} parent=19 // pred_check
        %p103 = pneg %p28
      $region22: #{actor_forward.1} parent=19 // pred_check_branch
        %105 = sbr.rel (%p103) target = $region24
      $region23: #{actor_forward.1} parent=19 // pred_region
        %s106 = smul.u32 16, %s8
        %p107 = scmp.lt.s32.totalorder %s106, 31
        %s108 = scalar_select %p107, %s106, 31
        %s109 = smul.addr %s108, 8
        %s110 = scalar_lea.vmem %s0, %s109
        %s111 = smul.u32 16, %s8
      $region24: #{actor_forward.1} parent=19 // pred_fallthru
        _
    $region20: #{actor_forward.1} parent=5 // pred_fallthru
      _
    %p112 = scmp.le.s32.totalorder 1, %s8
    %p113 = scmp.lt.s32.totalorder %s8, 3
    %p114 = pnand %p112, %p113
    %p115 = pneg %p114
    // Predicated region
    $region25: #{actor_forward.1} parent=5 // pred_check
      _
    $region26: #{actor_forward.1} parent=5 // pred_check_branch
      %117 = sbr.rel (%p114) target = $region28
    $region27: #{actor_forward.1} parent=5 // pred_region
      %s118 = ssub.s32 %s8, 1
      %s119 = smul.u32 16, %s13
      %p120 = scmp.lt.s32.totalorder %s119, 31
      %s121 = scalar_select %p120, %s119, 31
      %s122 = smul.addr %s121, 8
      %s123 = scalar_lea.vmem %s0, %s122
      %p124 = pneg %p34
      %p125 = pneg %p31
      %p126 = pneg %p55
      %p127 = pneg %p52
      %p128 = pneg %p81
      %p129 = pneg %p78
      %s130 = smul.u32 16, %s13
      %p131 = scmp.lt.s32.totalorder %s130, 31
      %s132 = scalar_select %p131, %s130, 31
      %s133 = smul.addr %s132, 8
      %s134 = scalar_lea.vmem %s2, %s133
      %s135 = smul.u32 16, %s13
      %p136 = scmp.lt.s32.totalorder %s135, 31
      %s137 = scalar_select %p136, %s135, 31
      %s138 = smul.addr %s137, 8
      %s139 = scalar_lea.vmem %s0, %s138
      %s140 = smul.u32 16, %s13
      %s141 = smul.u32 16, %s13
      %p142 = scmp.lt.s32.totalorder %s141, 31
      %s143 = scalar_select %p142, %s141, 31
      %s144 = smul.addr %s143, 8
      %s145 = scalar_lea.vmem %s2, %s144
      %s146 = smul.u32 16, %s13
      %v147 = vld [vmem:[%s139] sm:$0xff]
      %v148 = vld [vmem:[%s139 + $0x8] sm:$0xff]
      %v149 = vld [vmem:[%s139 + $0x10] sm:$0xff]
      %v150 = vld [vmem:[%s139 + $0x18] sm:$0xff]
      %v151 = vld [vmem:[%s139 + $0x20] sm:$0xff]
      %v152 = vld [vmem:[%s139 + $0x28] sm:$0xff]
      %v153 = vld [vmem:[%s139 + $0x30] sm:$0xff]
      %v154 = vld [vmem:[%s139 + $0x38] sm:$0xff]
      %v155 = vld [vmem:[%s139 + $0x40] sm:$0xff]
      %v156 = vld [vmem:[%s139 + $0x48] sm:$0xff]
      %v157 = vld [vmem:[%s139 + $0x50] sm:$0xff]
      %v158 = vld [vmem:[%s139 + $0x58] sm:$0xff]
      %v159 = vld [vmem:[%s139 + $0x60] sm:$0xff]
      %v160 = vld [vmem:[%s139 + $0x68] sm:$0xff]
      %v161 = vld [vmem:[%s139 + $0x70] sm:$0xff]
      %v162 = vld [vmem:[%s139 + $0x78] sm:$0xff]
      %v163 = vld [vmem:[%s1 + $0x20] sm:$0x1]
      %v164 = vld [vmem:[%s1] sm:$0x1]
      %166 = vset.pattern.permute.xlu0 0
      %167 = vperm.xlu0 %166, %v147
      %v168 = vpop.permute.xlu0 %167
      %171 = vset.pattern.permute.xlu0 0
      %172 = vperm.xlu0 %171, %v148
      %v173 = vpop.permute.xlu0 %172
      %176 = vset.pattern.permute.xlu0 0
      %177 = vperm.xlu0 %176, %v149
      %v178 = vpop.permute.xlu0 %177
      %181 = vset.pattern.permute.xlu0 0
      %182 = vperm.xlu0 %181, %v150
      %v183 = vpop.permute.xlu0 %182
      %186 = vset.pattern.permute.xlu0 0
      %187 = vperm.xlu0 %186, %v151
      %v188 = vpop.permute.xlu0 %187
      %191 = vset.pattern.permute.xlu0 0
      %192 = vperm.xlu0 %191, %v152
      %v193 = vpop.permute.xlu0 %192
      %196 = vset.pattern.permute.xlu0 0
      %197 = vperm.xlu0 %196, %v153
      %v198 = vpop.permute.xlu0 %197
      %201 = vset.pattern.permute.xlu0 0
      %202 = vperm.xlu0 %201, %v154
      %v203 = vpop.permute.xlu0 %202
      %206 = vset.pattern.permute.xlu0 0
      %207 = vperm.xlu0 %206, %v155
      %v208 = vpop.permute.xlu0 %207
      %211 = vset.pattern.permute.xlu0 0
      %212 = vperm.xlu0 %211, %v156
      %v213 = vpop.permute.xlu0 %212
      %216 = vset.pattern.permute.xlu0 0
      %217 = vperm.xlu0 %216, %v157
      %v218 = vpop.permute.xlu0 %217
      %221 = vset.pattern.permute.xlu0 0
      %222 = vperm.xlu0 %221, %v158
      %v223 = vpop.permute.xlu0 %222
      %226 = vset.pattern.permute.xlu0 0
      %227 = vperm.xlu0 %226, %v159
      %v228 = vpop.permute.xlu0 %227
      %231 = vset.pattern.permute.xlu0 0
      %232 = vperm.xlu0 %231, %v160
      %v233 = vpop.permute.xlu0 %232
      %236 = vset.pattern.permute.xlu0 0
      %237 = vperm.xlu0 %236, %v161
      %v238 = vpop.permute.xlu0 %237
      %241 = vset.pattern.permute.xlu0 0
      %242 = vperm.xlu0 %241, %v162
      %v243 = vpop.permute.xlu0 %242
      %v245 = vlaneseq
      %v246 = vshrl.u32 %v245, 7
      %v247 = vsub.s32 0, %v246
      %v248 = vrot.slane %v164, %v247
      %v249 = vmul.f32 %v168, %v248
      %v250 = vmul.f32 %v173, %v248
      %v251 = vmul.f32 %v178, %v248
      %v252 = vmul.f32 %v183, %v248
      %v253 = vmul.f32 %v188, %v248
      %v254 = vmul.f32 %v193, %v248
      %v255 = vmul.f32 %v198, %v248
      %v256 = vmul.f32 %v203, %v248
      %v257 = vmul.f32 %v208, %v248
      %v258 = vmul.f32 %v213, %v248
      %v259 = vmul.f32 %v218, %v248
      %v260 = vmul.f32 %v223, %v248
      %v261 = vmul.f32 %v228, %v248
      %v262 = vmul.f32 %v233, %v248
      %v263 = vmul.f32 %v238, %v248
      %v264 = vmul.f32 %v243, %v248
      %v265 = vlaneseq
      %v266 = vshrl.u32 %v265, 7
      %v267 = vsub.s32 0, %v266
      %v268 = vrot.slane %v163, %v267
      %v269 = vadd.f32 %v268, %v249
      %v270 = vadd.f32 %v268, %v250
      %v271 = vadd.f32 %v268, %v251
      %v272 = vadd.f32 %v268, %v252
      %v273 = vadd.f32 %v268, %v253
      %v274 = vadd.f32 %v268, %v254
      %v275 = vadd.f32 %v268, %v255
      %v276 = vadd.f32 %v268, %v256
      %v277 = vadd.f32 %v268, %v257
      %v278 = vadd.f32 %v268, %v258
      %v279 = vadd.f32 %v268, %v259
      %v280 = vadd.f32 %v268, %v260
      %v281 = vadd.f32 %v268, %v261
      %v282 = vadd.f32 %v268, %v262
      %v283 = vadd.f32 %v268, %v263
      %v284 = vadd.f32 %v268, %v264
      %v285 = vld [vmem:[%s1 + $0x1] sm:$0x1]
      %286 = vset.pattern.permute.xlu0 1
      %287 = vperm.xlu0 %286, %v147
      %v288 = vpop.permute.xlu0 %287
      %290 = vset.pattern.permute.xlu0 1
      %291 = vperm.xlu0 %290, %v148
      %v292 = vpop.permute.xlu0 %291
      %294 = vset.pattern.permute.xlu0 1
      %295 = vperm.xlu0 %294, %v149
      %v296 = vpop.permute.xlu0 %295
      %298 = vset.pattern.permute.xlu0 1
      %299 = vperm.xlu0 %298, %v150
      %v300 = vpop.permute.xlu0 %299
      %302 = vset.pattern.permute.xlu0 1
      %303 = vperm.xlu0 %302, %v151
      %v304 = vpop.permute.xlu0 %303
      %306 = vset.pattern.permute.xlu0 1
      %307 = vperm.xlu0 %306, %v152
      %v308 = vpop.permute.xlu0 %307
      %310 = vset.pattern.permute.xlu0 1
      %311 = vperm.xlu0 %310, %v153
      %v312 = vpop.permute.xlu0 %311
      %314 = vset.pattern.permute.xlu0 1
      %315 = vperm.xlu0 %314, %v154
      %v316 = vpop.permute.xlu0 %315
      %318 = vset.pattern.permute.xlu0 1
      %319 = vperm.xlu0 %318, %v155
      %v320 = vpop.permute.xlu0 %319
      %322 = vset.pattern.permute.xlu0 1
      %323 = vperm.xlu0 %322, %v156
      %v324 = vpop.permute.xlu0 %323
      %326 = vset.pattern.permute.xlu0 1
      %327 = vperm.xlu0 %326, %v157
      %v328 = vpop.permute.xlu0 %327
      %330 = vset.pattern.permute.xlu0 1
      %331 = vperm.xlu0 %330, %v158
      %v332 = vpop.permute.xlu0 %331
      %334 = vset.pattern.permute.xlu0 1
      %335 = vperm.xlu0 %334, %v159
      %v336 = vpop.permute.xlu0 %335
      %338 = vset.pattern.permute.xlu0 1
      %339 = vperm.xlu0 %338, %v160
      %v340 = vpop.permute.xlu0 %339
      %342 = vset.pattern.permute.xlu0 1
      %343 = vperm.xlu0 %342, %v161
      %v344 = vpop.permute.xlu0 %343
      %346 = vset.pattern.permute.xlu0 1
      %347 = vperm.xlu0 %346, %v162
      %v348 = vpop.permute.xlu0 %347
      %v350 = vlaneseq
      %v351 = vshrl.u32 %v350, 7
      %v352 = vsub.s32 0, %v351
      %v353 = vrot.slane %v285, %v352
      %v354 = vmul.f32 %v288, %v353
      %v355 = vmul.f32 %v292, %v353
      %v356 = vmul.f32 %v296, %v353
      %v357 = vmul.f32 %v300, %v353
      %v358 = vmul.f32 %v304, %v353
      %v359 = vmul.f32 %v308, %v353
      %v360 = vmul.f32 %v312, %v353
      %v361 = vmul.f32 %v316, %v353
      %v362 = vmul.f32 %v320, %v353
      %v363 = vmul.f32 %v324, %v353
      %v364 = vmul.f32 %v328, %v353
      %v365 = vmul.f32 %v332, %v353
      %v366 = vmul.f32 %v336, %v353
      %v367 = vmul.f32 %v340, %v353
      %v368 = vmul.f32 %v344, %v353
      %v369 = vmul.f32 %v348, %v353
      %v370 = vadd.f32 %v269, %v354
      %v371 = vadd.f32 %v270, %v355
      %v372 = vadd.f32 %v271, %v356
      %v373 = vadd.f32 %v272, %v357
      %v374 = vadd.f32 %v273, %v358
      %v375 = vadd.f32 %v274, %v359
      %v376 = vadd.f32 %v275, %v360
      %v377 = vadd.f32 %v276, %v361
      %v378 = vadd.f32 %v277, %v362
      %v379 = vadd.f32 %v278, %v363
      %v380 = vadd.f32 %v279, %v364
      %v381 = vadd.f32 %v280, %v365
      %v382 = vadd.f32 %v281, %v366
      %v383 = vadd.f32 %v282, %v367
      %v384 = vadd.f32 %v283, %v368
      %v385 = vadd.f32 %v284, %v369
      %v386 = vmax.f32 %v370, 0.0
      %v387 = vmax.f32 %v371, 0.0
      %v388 = vmax.f32 %v372, 0.0
      %v389 = vmax.f32 %v373, 0.0
      %v390 = vmax.f32 %v374, 0.0
      %v391 = vmax.f32 %v375, 0.0
      %v392 = vmax.f32 %v376, 0.0
      %v393 = vmax.f32 %v377, 0.0
      %v394 = vmax.f32 %v378, 0.0
      %v395 = vmax.f32 %v379, 0.0
      %v396 = vmax.f32 %v380, 0.0
      %v397 = vmax.f32 %v381, 0.0
      %v398 = vmax.f32 %v382, 0.0
      %v399 = vmax.f32 %v383, 0.0
      %v400 = vmax.f32 %v384, 0.0
      %v401 = vmax.f32 %v385, 0.0
      %s402 = scalar_lea.vmem %s1, 40
      %v403 = vld [vmem:[%s402] sm:$0xff]
      %v404 = vld [vmem:[%s402 + $0x8] sm:$0xff]
      %v405 = vld [vmem:[%s402 + $0x10] sm:$0xff]
      %v406 = vld [vmem:[%s402 + $0x18] sm:$0xff]
      %v407 = vld [vmem:[%s402 + $0x20] sm:$0x1]
      %v408 = vlaneseq
      %v409 = vshrl.u32 %v408, 7
      %v410 = vsub.s32 0, %v409
      %v411 = vrot.slane %v407, %v410
      %vm412 = vcmask 261120
      %v414 = vsel %vm412, %v386, 0
      %v417 = vsel %vm412, %v387, 0
      %v420 = vsel %vm412, %v388, 0
      %v423 = vsel %vm412, %v389, 0
      %v426 = vsel %vm412, %v390, 0
      %v429 = vsel %vm412, %v391, 0
      %v432 = vsel %vm412, %v392, 0
      %v435 = vsel %vm412, %v393, 0
      %v438 = vsel %vm412, %v394, 0
      %v441 = vsel %vm412, %v395, 0
      %v444 = vsel %vm412, %v396, 0
      %v447 = vsel %vm412, %v397, 0
      %v450 = vsel %vm412, %v398, 0
      %v453 = vsel %vm412, %v399, 0
      %v456 = vsel %vm412, %v400, 0
      %v459 = vsel %vm412, %v401, 0
      %461 = vmatprep.subr.mxu0 0.0
      %v462 = vand.u32 %v403, 4294901760
      %463 = vmatpush1.msra.mxu0 %v462
      %464 = vmatprep.subr.mxu0 0.0
      %v465 = vand.u32 %v404, 4294901760
      %466 = vmatpush1.msra.mxu0 %v465
      %467 = vmatprep.subr.mxu0 0.0
      %v468 = vand.u32 %v405, 4294901760
      %469 = vmatpush1.msra.mxu0 %v468
      %470 = vmatprep.subr.mxu0 0.0
      %v471 = vand.u32 %v406, 4294901760
      %472 = vmatpush1.msra.mxu0 %v471
      %473 = vmatprep.subr.mxu0 0.0
      %474 = vmatpush1.msra.mxu0 0.0
      %475 = vmatprep.subr.mxu0 0.0
      %476 = vmatpush1.msra.mxu0 0.0
      %477 = vmatprep.subr.mxu0 0.0
      %478 = vmatpush1.msra.mxu0 0.0
      %479 = vmatprep.subr.mxu0 0.0
      %480 = vmatpush1.msra.mxu0 0.0
      %481 = vmatprep.subr.mxu0 0.0
      %482 = vmatpush1.msra.mxu0 0.0
      %483 = vmatprep.subr.mxu0 0.0
      %484 = vmatpush1.msra.mxu0 0.0
      %485 = vmatprep.subr.mxu0 0.0
      %486 = vmatpush1.msra.mxu0 0.0
      %487 = vmatprep.subr.mxu0 0.0
      %488 = vmatpush1.msra.mxu0 0.0
      %489 = vmatprep.subr.mxu0 0.0
      %490 = vmatpush1.msra.mxu0 0.0
      %491 = vmatprep.subr.mxu0 0.0
      %492 = vmatpush1.msra.mxu0 0.0
      %493 = vmatprep.subr.mxu0 0.0
      %494 = vmatpush1.msra.mxu0 0.0
      %495 = vmatprep.subr.mxu0 0.0
      %496 = vmatpush1.msra.mxu0 0.0
      %497 = vmatprep.subr.mxu0 0.0
      %498 = vmatpush1.msra.mxu0 0.0
      %499 = vmatprep.subr.mxu0 0.0
      %500 = vmatpush1.msra.mxu0 0.0
      %501 = vmatprep.subr.mxu0 0.0
      %502 = vmatpush1.msra.mxu0 0.0
      %503 = vmatprep.subr.mxu0 0.0
      %504 = vmatpush1.msra.mxu0 0.0
      %505 = vmatprep.subr.mxu0 0.0
      %506 = vmatpush1.msra.mxu0 0.0
      %507 = vmatprep.subr.mxu0 0.0
      %508 = vmatpush1.msra.mxu0 0.0
      %509 = vmatprep.subr.mxu0 0.0
      %510 = vmatpush1.msra.mxu0 0.0
      %511 = vmatprep.subr.mxu0 0.0
      %512 = vmatpush1.msra.mxu0 0.0
      %513 = vmatprep.subr.mxu0 0.0
      %514 = vmatpush1.msra.mxu0 0.0
      %515 = vmatprep.subr.mxu0 0.0
      %516 = vmatpush1.msra.mxu0 0.0
      %517 = vmatprep.subr.mxu0 0.0
      %518 = vmatpush1.msra.mxu0 0.0
      %519 = vmatprep.subr.mxu0 0.0
      %520 = vmatpush1.msra.mxu0 0.0
      %521 = vmatprep.subr.mxu0 0.0
      %522 = vmatpush1.msra.mxu0 0.0
      %523 = vmatprep.subr.mxu0 0.0
      %524 = vmatpush1.msra.mxu0 0.0
      %525 = vmatprep.subr.mxu0 0.0
      %526 = vmatpush1.msra.mxu0 0.0
      %527 = vmatprep.subr.mxu0 0.0
      %528 = vmatpush1.msra.mxu0 0.0
      %529 = vmatprep.mubr.f32.mxu0 0.0
      %v530 = vand.u32 %v414, 4294901760
      %v531 = vsub.f32 %v414, %v530
      %v532 = vand.u32 %v531, 4294901760
      %v533 = vsub.f32 %v531, %v532
      %v534 = vand.u32 %v533, 4294901760
      %535 = vmatmul.mubr.f32.gmra.mrb[0].mxu0 %v534
      %v536 = vpop.f32.mrb[0].mxu0
      %v537 = vadd.f32 %v411, %v536
      %v538 = vpop.f32.mrb[0].mxu0
      %539 = vmatprep.mubr.f32.mxu0 0.0
      %v540 = vand.u32 %v417, 4294901760
      %v541 = vsub.f32 %v417, %v540
      %v542 = vand.u32 %v541, 4294901760
      %v543 = vsub.f32 %v541, %v542
      %v544 = vand.u32 %v543, 4294901760
      %545 = vmatmul.mubr.f32.gmra.mrb[0].mxu0 %v544
      %v546 = vpop.f32.mrb[0].mxu0
      %v547 = vadd.f32 %v411, %v546
      %v548 = vpop.f32.mrb[0].mxu0
      %549 = vmatprep.mubr.f32.mxu0 0.0
      %v550 = vand.u32 %v420, 4294901760
      %v551 = vsub.f32 %v420, %v550
      %v552 = vand.u32 %v551, 4294901760
      %v553 = vsub.f32 %v551, %v552
      %v554 = vand.u32 %v553, 4294901760
      %555 = vmatmul.mubr.f32.gmra.mrb[0].mxu0 %v554
      %v556 = vpop.f32.mrb[0].mxu0
      %v557 = vadd.f32 %v411, %v556
      %v558 = vpop.f32.mrb[0].mxu0
      %559 = vmatprep.mubr.f32.mxu0 0.0
      %v560 = vand.u32 %v423, 4294901760
      %v561 = vsub.f32 %v423, %v560
      %v562 = vand.u32 %v561, 4294901760
      %v563 = vsub.f32 %v561, %v562
      %v564 = vand.u32 %v563, 4294901760
      %565 = vmatmul.mubr.f32.gmra.mrb[0].mxu0 %v564
      %v566 = vpop.f32.mrb[0].mxu0
      %v567 = vadd.f32 %v411, %v566
      %v568 = vpop.f32.mrb[0].mxu0
      %569 = vmatprep.mubr.f32.mxu0 0.0
      %v570 = vand.u32 %v426, 4294901760
      %v571 = vsub.f32 %v426, %v570
      %v572 = vand.u32 %v571, 4294901760
      %v573 = vsub.f32 %v571, %v572
      %v574 = vand.u32 %v573, 4294901760
      %575 = vmatmul.mubr.f32.gmra.mrb[0].mxu0 %v574
      %v576 = vpop.f32.mrb[0].mxu0
      %v577 = vadd.f32 %v411, %v576
      %v578 = vpop.f32.mrb[0].mxu0
      %579 = vmatprep.mubr.f32.mxu0 0.0
      %v580 = vand.u32 %v429, 4294901760
      %v581 = vsub.f32 %v429, %v580
      %v582 = vand.u32 %v581, 4294901760
      %v583 = vsub.f32 %v581, %v582
      %v584 = vand.u32 %v583, 4294901760
      %585 = vmatmul.mubr.f32.gmra.mrb[0].mxu0 %v584
      %v586 = vpop.f32.mrb[0].mxu0
      %v587 = vadd.f32 %v411, %v586
      %v588 = vpop.f32.mrb[0].mxu0
      %589 = vmatprep.mubr.f32.mxu0 0.0
      %v590 = vand.u32 %v432, 4294901760
      %v591 = vsub.f32 %v432, %v590
      %v592 = vand.u32 %v591, 4294901760
      %v593 = vsub.f32 %v591, %v592
      %v594 = vand.u32 %v593, 4294901760
      %595 = vmatmul.mubr.f32.gmra.mrb[0].mxu0 %v594
      %v596 = vpop.f32.mrb[0].mxu0
      %v597 = vadd.f32 %v411, %v596
      %v598 = vpop.f32.mrb[0].mxu0
      %599 = vmatprep.mubr.f32.mxu0 0.0
      %v600 = vand.u32 %v435, 4294901760
      %v601 = vsub.f32 %v435, %v600
      %v602 = vand.u32 %v601, 4294901760
      %v603 = vsub.f32 %v601, %v602
      %v604 = vand.u32 %v603, 4294901760
      %605 = vmatmul.mubr.f32.gmra.mrb[0].mxu0 %v604
      %v606 = vpop.f32.mrb[0].mxu0
      %v607 = vadd.f32 %v411, %v606
      %v608 = vpop.f32.mrb[0].mxu0
      %609 = vmatprep.mubr.f32.mxu0 0.0
      %v610 = vand.u32 %v438, 4294901760
      %v611 = vsub.f32 %v438, %v610
      %v612 = vand.u32 %v611, 4294901760
      %v613 = vsub.f32 %v611, %v612
      %v614 = vand.u32 %v613, 4294901760
      %615 = vmatmul.mubr.f32.gmra.mrb[0].mxu0 %v614
      %v616 = vpop.f32.mrb[0].mxu0
      %v617 = vadd.f32 %v411, %v616
      %v618 = vpop.f32.mrb[0].mxu0
      %619 = vmatprep.mubr.f32.mxu0 0.0
      %v620 = vand.u32 %v441, 4294901760
      %v621 = vsub.f32 %v441, %v620
      %v622 = vand.u32 %v621, 4294901760
      %v623 = vsub.f32 %v621, %v622
      %v624 = vand.u32 %v623, 4294901760
      %625 = vmatmul.mubr.f32.gmra.mrb[0].mxu0 %v624
      %v626 = vpop.f32.mrb[0].mxu0
      %v627 = vadd.f32 %v411, %v626
      %v628 = vpop.f32.mrb[0].mxu0
      %629 = vmatprep.mubr.f32.mxu0 0.0
      %v630 = vand.u32 %v444, 4294901760
      %v631 = vsub.f32 %v444, %v630
      %v632 = vand.u32 %v631, 4294901760
      %v633 = vsub.f32 %v631, %v632
      %v634 = vand.u32 %v633, 4294901760
      %635 = vmatmul.mubr.f32.gmra.mrb[0].mxu0 %v634
      %v636 = vpop.f32.mrb[0].mxu0
      %v637 = vadd.f32 %v411, %v636
      %v638 = vpop.f32.mrb[0].mxu0
      %639 = vmatprep.mubr.f32.mxu0 0.0
      %v640 = vand.u32 %v447, 4294901760
      %v641 = vsub.f32 %v447, %v640
      %v642 = vand.u32 %v641, 4294901760
      %v643 = vsub.f32 %v641, %v642
      %v644 = vand.u32 %v643, 4294901760
      %645 = vmatmul.mubr.f32.gmra.mrb[0].mxu0 %v644
      %v646 = vpop.f32.mrb[0].mxu0
      %v647 = vadd.f32 %v411, %v646
      %v648 = vpop.f32.mrb[0].mxu0
      %649 = vmatprep.mubr.f32.mxu0 0.0
      %v650 = vand.u32 %v450, 4294901760
      %v651 = vsub.f32 %v450, %v650
      %v652 = vand.u32 %v651, 4294901760
      %v653 = vsub.f32 %v651, %v652
      %v654 = vand.u32 %v653, 4294901760
      %655 = vmatmul.mubr.f32.gmra.mrb[0].mxu0 %v654
      %v656 = vpop.f32.mrb[0].mxu0
      %v657 = vadd.f32 %v411, %v656
      %v658 = vpop.f32.mrb[0].mxu0
      %659 = vmatprep.mubr.f32.mxu0 0.0
      %v660 = vand.u32 %v453, 4294901760
      %v661 = vsub.f32 %v453, %v660
      %v662 = vand.u32 %v661, 4294901760
      %v663 = vsub.f32 %v661, %v662
      %v664 = vand.u32 %v663, 4294901760
      %665 = vmatmul.mubr.f32.gmra.mrb[0].mxu0 %v664
      %v666 = vpop.f32.mrb[0].mxu0
      %v667 = vadd.f32 %v411, %v666
      %v668 = vpop.f32.mrb[0].mxu0
      %669 = vmatprep.mubr.f32.mxu0 0.0
      %v670 = vand.u32 %v456, 4294901760
      %v671 = vsub.f32 %v456, %v670
      %v672 = vand.u32 %v671, 4294901760
      %v673 = vsub.f32 %v671, %v672
      %v674 = vand.u32 %v673, 4294901760
      %675 = vmatmul.mubr.f32.gmra.mrb[0].mxu0 %v674
      %v676 = vpop.f32.mrb[0].mxu0
      %v677 = vadd.f32 %v411, %v676
      %v678 = vpop.f32.mrb[0].mxu0
      %679 = vmatprep.mubr.f32.mxu0 0.0
      %v680 = vand.u32 %v459, 4294901760
      %v681 = vsub.f32 %v459, %v680
      %v682 = vand.u32 %v681, 4294901760
      %v683 = vsub.f32 %v681, %v682
      %v684 = vand.u32 %v683, 4294901760
      %685 = vmatmul.mubr.f32.gmra.mrb[0].mxu0 %v684
      %v686 = vpop.f32.mrb[0].mxu0
      %v687 = vadd.f32 %v411, %v686
      %v688 = vpop.f32.mrb[0].mxu0
      %689 = vdwg.mxu0
      %690 = vmatprep.subr.mxu0 0.0
      %v691 = vand.u32 %v403, 4294901760
      %v692 = vsub.f32 %v403, %v691
      %v693 = vand.u32 %v692, 4294901760
      %v694 = vsub.f32 %v692, %v693
      %v695 = vand.u32 %v694, 4294901760
      %696 = vmatpush1.msra.mxu0 %v695
      %697 = vmatprep.subr.mxu0 0.0
      %v698 = vand.u32 %v404, 4294901760
      %v699 = vsub.f32 %v404, %v698
      %v700 = vand.u32 %v699, 4294901760
      %v701 = vsub.f32 %v699, %v700
      %v702 = vand.u32 %v701, 4294901760
      %703 = vmatpush1.msra.mxu0 %v702
      %704 = vmatprep.subr.mxu0 0.0
      %v705 = vand.u32 %v405, 4294901760
      %v706 = vsub.f32 %v405, %v705
      %v707 = vand.u32 %v706, 4294901760
      %v708 = vsub.f32 %v706, %v707
      %v709 = vand.u32 %v708, 4294901760
      %710 = vmatpush1.msra.mxu0 %v709
      %711 = vmatprep.subr.mxu0 0.0
      %v712 = vand.u32 %v406, 4294901760
      %v713 = vsub.f32 %v406, %v712
      %v714 = vand.u32 %v713, 4294901760
      %v715 = vsub.f32 %v713, %v714
      %v716 = vand.u32 %v715, 4294901760
      %717 = vmatpush1.msra.mxu0 %v716
      %718 = vmatprep.subr.mxu0 0.0
      %719 = vmatpush1.msra.mxu0 0.0
      %720 = vmatprep.subr.mxu0 0.0
      %721 = vmatpush1.msra.mxu0 0.0
      %722 = vmatprep.subr.mxu0 0.0
      %723 = vmatpush1.msra.mxu0 0.0
      %724 = vmatprep.subr.mxu0 0.0
      %725 = vmatpush1.msra.mxu0 0.0
      %726 = vmatprep.subr.mxu0 0.0
      %727 = vmatpush1.msra.mxu0 0.0
      %728 = vmatprep.subr.mxu0 0.0
      %729 = vmatpush1.msra.mxu0 0.0
      %730 = vmatprep.subr.mxu0 0.0
      %731 = vmatpush1.msra.mxu0 0.0
      %732 = vmatprep.subr.mxu0 0.0
      %733 = vmatpush1.msra.mxu0 0.0
      %734 = vmatprep.subr.mxu0 0.0
      %735 = vmatpush1.msra.mxu0 0.0
      %736 = vmatprep.subr.mxu0 0.0
      %737 = vmatpush1.msra.mxu0 0.0
      %738 = vmatprep.subr.mxu0 0.0
      %739 = vmatpush1.msra.mxu0 0.0
      %740 = vmatprep.subr.mxu0 0.0
      %741 = vmatpush1.msra.mxu0 0.0
      %742 = vmatprep.subr.mxu0 0.0
      %743 = vmatpush1.msra.mxu0 0.0
      %744 = vmatprep.subr.mxu0 0.0
      %745 = vmatpush1.msra.mxu0 0.0
      %746 = vmatprep.subr.mxu0 0.0
      %747 = vmatpush1.msra.mxu0 0.0
      %748 = vmatprep.subr.mxu0 0.0
      %749 = vmatpush1.msra.mxu0 0.0
      %750 = vmatprep.subr.mxu0 0.0
      %751 = vmatpush1.msra.mxu0 0.0
      %752 = vmatprep.subr.mxu0 0.0
      %753 = vmatpush1.msra.mxu0 0.0
      %754 = vmatprep.subr.mxu0 0.0
      %755 = vmatpush1.msra.mxu0 0.0
      %756 = vmatprep.subr.mxu0 0.0
      %757 = vmatpush1.msra.mxu0 0.0
      %758 = vmatprep.subr.mxu0 0.0
      %759 = vmatpush1.msra.mxu0 0.0
      %760 = vmatprep.subr.mxu0 0.0
      %761 = vmatpush1.msra.mxu0 0.0
      %762 = vmatprep.subr.mxu0 0.0
      %763 = vmatpush1.msra.mxu0 0.0
      %764 = vmatprep.subr.mxu0 0.0
      %765 = vmatpush1.msra.mxu0 0.0
      %766 = vmatprep.subr.mxu0 0.0
      %767 = vmatpush1.msra.mxu0 0.0
      %768 = vmatprep.subr.mxu0 0.0
      %769 = vmatpush1.msra.mxu0 0.0
      %770 = vmatprep.subr.mxu0 0.0
      %771 = vmatpush1.msra.mxu0 0.0
      %772 = vmatprep.subr.mxu0 0.0
      %773 = vmatpush1.msra.mxu0 0.0
      %774 = vmatprep.mubr.f32.mxu0 0.0
      %v775 = vand.u32 %v414, 4294901760
      %776 = vmatmul.mubr.f32.gmra.mrb[0].mxu0 %v775
      %v777 = vpop.f32.mrb[0].mxu0
      %v778 = vadd.f32 %v537, %v777
      %v779 = vpop.f32.mrb[0].mxu0
      %780 = vmatprep.mubr.f32.mxu0 0.0
      %v781 = vand.u32 %v417, 4294901760
      %782 = vmatmul.mubr.f32.gmra.mrb[0].mxu0 %v781
      %v783 = vpop.f32.mrb[0].mxu0
      %v784 = vadd.f32 %v547, %v783
      %v785 = vpop.f32.mrb[0].mxu0
      %786 = vmatprep.mubr.f32.mxu0 0.0
      %v787 = vand.u32 %v420, 4294901760
      %788 = vmatmul.mubr.f32.gmra.mrb[0].mxu0 %v787
      %v789 = vpop.f32.mrb[0].mxu0
      %v790 = vadd.f32 %v557, %v789
      %v791 = vpop.f32.mrb[0].mxu0
      %792 = vmatprep.mubr.f32.mxu0 0.0
      %v793 = vand.u32 %v423, 4294901760
      %794 = vmatmul.mubr.f32.gmra.mrb[0].mxu0 %v793
      %v795 = vpop.f32.mrb[0].mxu0
      %v796 = vadd.f32 %v567, %v795
      %v797 = vpop.f32.mrb[0].mxu0
      %798 = vmatprep.mubr.f32.mxu0 0.0
      %v799 = vand.u32 %v426, 4294901760
      %800 = vmatmul.mubr.f32.gmra.mrb[0].mxu0 %v799
      %v801 = vpop.f32.mrb[0].mxu0
      %v802 = vadd.f32 %v577, %v801
      %v803 = vpop.f32.mrb[0].mxu0
      %804 = vmatprep.mubr.f32.mxu0 0.0
      %v805 = vand.u32 %v429, 4294901760
      %806 = vmatmul.mubr.f32.gmra.mrb[0].mxu0 %v805
      %v807 = vpop.f32.mrb[0].mxu0
      %v808 = vadd.f32 %v587, %v807
      %v809 = vpop.f32.mrb[0].mxu0
      %810 = vmatprep.mubr.f32.mxu0 0.0
      %v811 = vand.u32 %v432, 4294901760
      %812 = vmatmul.mubr.f32.gmra.mrb[0].mxu0 %v811
      %v813 = vpop.f32.mrb[0].mxu0
      %v814 = vadd.f32 %v597, %v813
      %v815 = vpop.f32.mrb[0].mxu0
      %816 = vmatprep.mubr.f32.mxu0 0.0
      %v817 = vand.u32 %v435, 4294901760
      %818 = vmatmul.mubr.f32.gmra.mrb[0].mxu0 %v817
      %v819 = vpop.f32.mrb[0].mxu0
      %v820 = vadd.f32 %v607, %v819
      %v821 = vpop.f32.mrb[0].mxu0
      %822 = vmatprep.mubr.f32.mxu0 0.0
      %v823 = vand.u32 %v438, 4294901760
      %824 = vmatmul.mubr.f32.gmra.mrb[0].mxu0 %v823
      %v825 = vpop.f32.mrb[0].mxu0
      %v826 = vadd.f32 %v617, %v825
      %v827 = vpop.f32.mrb[0].mxu0
      %828 = vmatprep.mubr.f32.mxu0 0.0
      %v829 = vand.u32 %v441, 4294901760
      %830 = vmatmul.mubr.f32.gmra.mrb[0].mxu0 %v829
      %v831 = vpop.f32.mrb[0].mxu0
      %v832 = vadd.f32 %v627, %v831
      %v833 = vpop.f32.mrb[0].mxu0
      %834 = vmatprep.mubr.f32.mxu0 0.0
      %v835 = vand.u32 %v444, 4294901760
      %836 = vmatmul.mubr.f32.gmra.mrb[0].mxu0 %v835
      %v837 = vpop.f32.mrb[0].mxu0
      %v838 = vadd.f32 %v637, %v837
      %v839 = vpop.f32.mrb[0].mxu0
      %840 = vmatprep.mubr.f32.mxu0 0.0
      %v841 = vand.u32 %v447, 4294901760
      %842 = vmatmul.mubr.f32.gmra.mrb[0].mxu0 %v841
      %v843 = vpop.f32.mrb[0].mxu0
      %v844 = vadd.f32 %v647, %v843
      %v845 = vpop.f32.mrb[0].mxu0
      %846 = vmatprep.mubr.f32.mxu0 0.0
      %v847 = vand.u32 %v450, 4294901760
      %848 = vmatmul.mubr.f32.gmra.mrb[0].mxu0 %v847
      %v849 = vpop.f32.mrb[0].mxu0
      %v850 = vadd.f32 %v657, %v849
      %v851 = vpop.f32.mrb[0].mxu0
      %852 = vmatprep.mubr.f32.mxu0 0.0
      %v853 = vand.u32 %v453, 4294901760
      %854 = vmatmul.mubr.f32.gmra.mrb[0].mxu0 %v853
      %v855 = vpop.f32.mrb[0].mxu0
      %v856 = vadd.f32 %v667, %v855
      %v857 = vpop.f32.mrb[0].mxu0
      %858 = vmatprep.mubr.f32.mxu0 0.0
      %v859 = vand.u32 %v456, 4294901760
      %860 = vmatmul.mubr.f32.gmra.mrb[0].mxu0 %v859
      %v861 = vpop.f32.mrb[0].mxu0
      %v862 = vadd.f32 %v677, %v861
      %v863 = vpop.f32.mrb[0].mxu0
      %864 = vmatprep.mubr.f32.mxu0 0.0
      %v865 = vand.u32 %v459, 4294901760
      %866 = vmatmul.mubr.f32.gmra.mrb[0].mxu0 %v865
      %v867 = vpop.f32.mrb[0].mxu0
      %v868 = vadd.f32 %v687, %v867
      %v869 = vpop.f32.mrb[0].mxu0
      %870 = vdwg.mxu0
      %871 = vmatprep.subr.mxu0 0.0
      %v872 = vand.u32 %v403, 4294901760
      %v873 = vsub.f32 %v403, %v872
      %874 = vmatpush1.msra.mxu0 %v873
      %875 = vmatprep.subr.mxu0 0.0
      %v876 = vand.u32 %v404, 4294901760
      %v877 = vsub.f32 %v404, %v876
      %878 = vmatpush1.msra.mxu0 %v877
      %879 = vmatprep.subr.mxu0 0.0
      %v880 = vand.u32 %v405, 4294901760
      %v881 = vsub.f32 %v405, %v880
      %882 = vmatpush1.msra.mxu0 %v881
      %883 = vmatprep.subr.mxu0 0.0
      %v884 = vand.u32 %v406, 4294901760
      %v885 = vsub.f32 %v406, %v884
      %886 = vmatpush1.msra.mxu0 %v885
      %887 = vmatprep.subr.mxu0 0.0
      %888 = vmatpush1.msra.mxu0 0.0
      %889 = vmatprep.subr.mxu0 0.0
      %890 = vmatpush1.msra.mxu0 0.0
      %891 = vmatprep.subr.mxu0 0.0
      %892 = vmatpush1.msra.mxu0 0.0
      %893 = vmatprep.subr.mxu0 0.0
      %894 = vmatpush1.msra.mxu0 0.0
      %895 = vmatprep.subr.mxu0 0.0
      %896 = vmatpush1.msra.mxu0 0.0
      %897 = vmatprep.subr.mxu0 0.0
      %898 = vmatpush1.msra.mxu0 0.0
      %899 = vmatprep.subr.mxu0 0.0
      %900 = vmatpush1.msra.mxu0 0.0
      %901 = vmatprep.subr.mxu0 0.0
      %902 = vmatpush1.msra.mxu0 0.0
      %903 = vmatprep.subr.mxu0 0.0
      %904 = vmatpush1.msra.mxu0 0.0
      %905 = vmatprep.subr.mxu0 0.0
      %906 = vmatpush1.msra.mxu0 0.0
      %907 = vmatprep.subr.mxu0 0.0
      %908 = vmatpush1.msra.mxu0 0.0
      %909 = vmatprep.subr.mxu0 0.0
      %910 = vmatpush1.msra.mxu0 0.0
      %911 = vmatprep.subr.mxu0 0.0
      %912 = vmatpush1.msra.mxu0 0.0
      %913 = vmatprep.subr.mxu0 0.0
      %914 = vmatpush1.msra.mxu0 0.0
      %915 = vmatprep.subr.mxu0 0.0
      %916 = vmatpush1.msra.mxu0 0.0
      %917 = vmatprep.subr.mxu0 0.0
      %918 = vmatpush1.msra.mxu0 0.0
      %919 = vmatprep.subr.mxu0 0.0
      %920 = vmatpush1.msra.mxu0 0.0
      %921 = vmatprep.subr.mxu0 0.0
      %922 = vmatpush1.msra.mxu0 0.0
      %923 = vmatprep.subr.mxu0 0.0
      %924 = vmatpush1.msra.mxu0 0.0
      %925 = vmatprep.subr.mxu0 0.0
      %926 = vmatpush1.msra.mxu0 0.0
      %927 = vmatprep.subr.mxu0 0.0
      %928 = vmatpush1.msra.mxu0 0.0
      %929 = vmatprep.subr.mxu0 0.0
      %930 = vmatpush1.msra.mxu0 0.0
      %931 = vmatprep.subr.mxu0 0.0
      %932 = vmatpush1.msra.mxu0 0.0
      %933 = vmatprep.subr.mxu0 0.0
      %934 = vmatpush1.msra.mxu0 0.0
      %935 = vmatprep.subr.mxu0 0.0
      %936 = vmatpush1.msra.mxu0 0.0
      %937 = vmatprep.subr.mxu0 0.0
      %938 = vmatpush1.msra.mxu0 0.0
      %939 = vmatprep.subr.mxu0 0.0
      %940 = vmatpush1.msra.mxu0 0.0
      %941 = vmatprep.subr.mxu0 0.0
      %942 = vmatpush1.msra.mxu0 0.0
      %943 = vmatprep.mubr.f32.mxu0 0.0
      %v944 = vand.u32 %v414, 4294901760
      %v945 = vsub.f32 %v414, %v944
      %946 = vmatmul.mubr.f32.gmra.mrb[0].mxu0 %v945
      %v947 = vpop.f32.mrb[0].mxu0
      %v948 = vadd.f32 %v778, %v947
      %v949 = vpop.f32.mrb[0].mxu0
      %950 = vmatprep.mubr.f32.mxu0 0.0
      %v951 = vand.u32 %v417, 4294901760
      %v952 = vsub.f32 %v417, %v951
      %953 = vmatmul.mubr.f32.gmra.mrb[0].mxu0 %v952
      %v954 = vpop.f32.mrb[0].mxu0
      %v955 = vadd.f32 %v784, %v954
      %v956 = vpop.f32.mrb[0].mxu0
      %957 = vmatprep.mubr.f32.mxu0 0.0
      %v958 = vand.u32 %v420, 4294901760
      %v959 = vsub.f32 %v420, %v958
      %960 = vmatmul.mubr.f32.gmra.mrb[0].mxu0 %v959
      %v961 = vpop.f32.mrb[0].mxu0
      %v962 = vadd.f32 %v790, %v961
      %v963 = vpop.f32.mrb[0].mxu0
      %964 = vmatprep.mubr.f32.mxu0 0.0
      %v965 = vand.u32 %v423, 4294901760
      %v966 = vsub.f32 %v423, %v965
      %967 = vmatmul.mubr.f32.gmra.mrb[0].mxu0 %v966
      %v968 = vpop.f32.mrb[0].mxu0
      %v969 = vadd.f32 %v796, %v968
      %v970 = vpop.f32.mrb[0].mxu0
      %971 = vmatprep.mubr.f32.mxu0 0.0
      %v972 = vand.u32 %v426, 4294901760
      %v973 = vsub.f32 %v426, %v972
      %974 = vmatmul.mubr.f32.gmra.mrb[0].mxu0 %v973
      %v975 = vpop.f32.mrb[0].mxu0
      %v976 = vadd.f32 %v802, %v975
      %v977 = vpop.f32.mrb[0].mxu0
      %978 = vmatprep.mubr.f32.mxu0 0.0
      %v979 = vand.u32 %v429, 4294901760
      %v980 = vsub.f32 %v429, %v979
      %981 = vmatmul.mubr.f32.gmra.mrb[0].mxu0 %v980
      %v982 = vpop.f32.mrb[0].mxu0
      %v983 = vadd.f32 %v808, %v982
      %v984 = vpop.f32.mrb[0].mxu0
      %985 = vmatprep.mubr.f32.mxu0 0.0
      %v986 = vand.u32 %v432, 4294901760
      %v987 = vsub.f32 %v432, %v986
      %988 = vmatmul.mubr.f32.gmra.mrb[0].mxu0 %v987
      %v989 = vpop.f32.mrb[0].mxu0
      %v990 = vadd.f32 %v814, %v989
      %v991 = vpop.f32.mrb[0].mxu0
      %992 = vmatprep.mubr.f32.mxu0 0.0
      %v993 = vand.u32 %v435, 4294901760
      %v994 = vsub.f32 %v435, %v993
      %995 = vmatmul.mubr.f32.gmra.mrb[0].mxu0 %v994
      %v996 = vpop.f32.mrb[0].mxu0
      %v997 = vadd.f32 %v820, %v996
      %v998 = vpop.f32.mrb[0].mxu0
      %999 = vmatprep.mubr.f32.mxu0 0.0
      %v1000 = vand.u32 %v438, 4294901760
      %v1001 = vsub.f32 %v438, %v1000
      %1002 = vmatmul.mubr.f32.gmra.mrb[0].mxu0 %v1001
      %v1003 = vpop.f32.mrb[0].mxu0
      %v1004 = vadd.f32 %v826, %v1003
      %v1005 = vpop.f32.mrb[0].mxu0
      %1006 = vmatprep.mubr.f32.mxu0 0.0
      %v1007 = vand.u32 %v441, 4294901760
      %v1008 = vsub.f32 %v441, %v1007
      %1009 = vmatmul.mubr.f32.gmra.mrb[0].mxu0 %v1008
      %v1010 = vpop.f32.mrb[0].mxu0
      %v1011 = vadd.f32 %v832, %v1010
      %v1012 = vpop.f32.mrb[0].mxu0
      %1013 = vmatprep.mubr.f32.mxu0 0.0
      %v1014 = vand.u32 %v444, 4294901760
      %v1015 = vsub.f32 %v444, %v1014
      %1016 = vmatmul.mubr.f32.gmra.mrb[0].mxu0 %v1015
      %v1017 = vpop.f32.mrb[0].mxu0
      %v1018 = vadd.f32 %v838, %v1017
      %v1019 = vpop.f32.mrb[0].mxu0
      %1020 = vmatprep.mubr.f32.mxu0 0.0
      %v1021 = vand.u32 %v447, 4294901760
      %v1022 = vsub.f32 %v447, %v1021
      %1023 = vmatmul.mubr.f32.gmra.mrb[0].mxu0 %v1022
      %v1024 = vpop.f32.mrb[0].mxu0
      %v1025 = vadd.f32 %v844, %v1024
      %v1026 = vpop.f32.mrb[0].mxu0
      %1027 = vmatprep.mubr.f32.mxu0 0.0
      %v1028 = vand.u32 %v450, 4294901760
      %v1029 = vsub.f32 %v450, %v1028
      %1030 = vmatmul.mubr.f32.gmra.mrb[0].mxu0 %v1029
      %v1031 = vpop.f32.mrb[0].mxu0
      %v1032 = vadd.f32 %v850, %v1031
      %v1033 = vpop.f32.mrb[0].mxu0
      %1034 = vmatprep.mubr.f32.mxu0 0.0
      %v1035 = vand.u32 %v453, 4294901760
      %v1036 = vsub.f32 %v453, %v1035
      %1037 = vmatmul.mubr.f32.gmra.mrb[0].mxu0 %v1036
      %v1038 = vpop.f32.mrb[0].mxu0
      %v1039 = vadd.f32 %v856, %v1038
      %v1040 = vpop.f32.mrb[0].mxu0
      %1041 = vmatprep.mubr.f32.mxu0 0.0
      %v1042 = vand.u32 %v456, 4294901760
      %v1043 = vsub.f32 %v456, %v1042
      %1044 = vmatmul.mubr.f32.gmra.mrb[0].mxu0 %v1043
      %v1045 = vpop.f32.mrb[0].mxu0
      %v1046 = vadd.f32 %v862, %v1045
      %v1047 = vpop.f32.mrb[0].mxu0
      %1048 = vmatprep.mubr.f32.mxu0 0.0
      %v1049 = vand.u32 %v459, 4294901760
      %v1050 = vsub.f32 %v459, %v1049
      %1051 = vmatmul.mubr.f32.gmra.mrb[0].mxu0 %v1050
      %v1052 = vpop.f32.mrb[0].mxu0
      %v1053 = vadd.f32 %v868, %v1052
      %v1054 = vpop.f32.mrb[0].mxu0
      %1055 = vdwg.mxu0
      %1056 = vmatprep.subr.mxu0 0.0
      %v1057 = vand.u32 %v403, 4294901760
      %1058 = vmatpush1.msra.mxu0 %v1057
      %1059 = vmatprep.subr.mxu0 0.0
      %v1060 = vand.u32 %v404, 4294901760
      %1061 = vmatpush1.msra.mxu0 %v1060
      %1062 = vmatprep.subr.mxu0 0.0
      %v1063 = vand.u32 %v405, 4294901760
      %1064 = vmatpush1.msra.mxu0 %v1063
      %1065 = vmatprep.subr.mxu0 0.0
      %v1066 = vand.u32 %v406, 4294901760
      %1067 = vmatpush1.msra.mxu0 %v1066
      %1068 = vmatprep.subr.mxu0 0.0
      %1069 = vmatpush1.msra.mxu0 0.0
      %1070 = vmatprep.subr.mxu0 0.0
      %1071 = vmatpush1.msra.mxu0 0.0
      %1072 = vmatprep.subr.mxu0 0.0
      %1073 = vmatpush1.msra.mxu0 0.0
      %1074 = vmatprep.subr.mxu0 0.0
      %1075 = vmatpush1.msra.mxu0 0.0
      %1076 = vmatprep.subr.mxu0 0.0
      %1077 = vmatpush1.msra.mxu0 0.0
      %1078 = vmatprep.subr.mxu0 0.0
      %1079 = vmatpush1.msra.mxu0 0.0
      %1080 = vmatprep.subr.mxu0 0.0
      %1081 = vmatpush1.msra.mxu0 0.0
      %1082 = vmatprep.subr.mxu0 0.0
      %1083 = vmatpush1.msra.mxu0 0.0
      %1084 = vmatprep.subr.mxu0 0.0
      %1085 = vmatpush1.msra.mxu0 0.0
      %1086 = vmatprep.subr.mxu0 0.0
      %1087 = vmatpush1.msra.mxu0 0.0
      %1088 = vmatprep.subr.mxu0 0.0
      %1089 = vmatpush1.msra.mxu0 0.0
      %1090 = vmatprep.subr.mxu0 0.0
      %1091 = vmatpush1.msra.mxu0 0.0
      %1092 = vmatprep.subr.mxu0 0.0
      %1093 = vmatpush1.msra.mxu0 0.0
      %1094 = vmatprep.subr.mxu0 0.0
      %1095 = vmatpush1.msra.mxu0 0.0
      %1096 = vmatprep.subr.mxu0 0.0
      %1097 = vmatpush1.msra.mxu0 0.0
      %1098 = vmatprep.subr.mxu0 0.0
      %1099 = vmatpush1.msra.mxu0 0.0
      %1100 = vmatprep.subr.mxu0 0.0
      %1101 = vmatpush1.msra.mxu0 0.0
      %1102 = vmatprep.subr.mxu0 0.0
      %1103 = vmatpush1.msra.mxu0 0.0
      %1104 = vmatprep.subr.mxu0 0.0
      %1105 = vmatpush1.msra.mxu0 0.0
      %1106 = vmatprep.subr.mxu0 0.0
      %1107 = vmatpush1.msra.mxu0 0.0
      %1108 = vmatprep.subr.mxu0 0.0
      %1109 = vmatpush1.msra.mxu0 0.0
      %1110 = vmatprep.subr.mxu0 0.0
      %1111 = vmatpush1.msra.mxu0 0.0
      %1112 = vmatprep.subr.mxu0 0.0
      %1113 = vmatpush1.msra.mxu0 0.0
      %1114 = vmatprep.subr.mxu0 0.0
      %1115 = vmatpush1.msra.mxu0 0.0
      %1116 = vmatprep.subr.mxu0 0.0
      %1117 = vmatpush1.msra.mxu0 0.0
      %1118 = vmatprep.subr.mxu0 0.0
      %1119 = vmatpush1.msra.mxu0 0.0
      %1120 = vmatprep.subr.mxu0 0.0
      %1121 = vmatpush1.msra.mxu0 0.0
      %1122 = vmatprep.subr.mxu0 0.0
      %1123 = vmatpush1.msra.mxu0 0.0
      %1124 = vmatprep.mubr.f32.mxu0 0.0
      %v1125 = vand.u32 %v414, 4294901760
      %v1126 = vsub.f32 %v414, %v1125
      %v1127 = vand.u32 %v1126, 4294901760
      %1128 = vmatmul.mubr.f32.gmra.mrb[0].mxu0 %v1127
      %v1129 = vpop.f32.mrb[0].mxu0
      %v1130 = vadd.f32 %v948, %v1129
      %v1131 = vpop.f32.mrb[0].mxu0
      %1132 = vmatprep.mubr.f32.mxu0 0.0
      %v1133 = vand.u32 %v417, 4294901760
      %v1134 = vsub.f32 %v417, %v1133
      %v1135 = vand.u32 %v1134, 4294901760
      %1136 = vmatmul.mubr.f32.gmra.mrb[0].mxu0 %v1135
      %v1137 = vpop.f32.mrb[0].mxu0
      %v1138 = vadd.f32 %v955, %v1137
      %v1139 = vpop.f32.mrb[0].mxu0
      %1140 = vmatprep.mubr.f32.mxu0 0.0
      %v1141 = vand.u32 %v420, 4294901760
      %v1142 = vsub.f32 %v420, %v1141
      %v1143 = vand.u32 %v1142, 4294901760
      %1144 = vmatmul.mubr.f32.gmra.mrb[0].mxu0 %v1143
      %v1145 = vpop.f32.mrb[0].mxu0
      %v1146 = vadd.f32 %v962, %v1145
      %v1147 = vpop.f32.mrb[0].mxu0
      %1148 = vmatprep.mubr.f32.mxu0 0.0
      %v1149 = vand.u32 %v423, 4294901760
      %v1150 = vsub.f32 %v423, %v1149
      %v1151 = vand.u32 %v1150, 4294901760
      %1152 = vmatmul.mubr.f32.gmra.mrb[0].mxu0 %v1151
      %v1153 = vpop.f32.mrb[0].mxu0
      %v1154 = vadd.f32 %v969, %v1153
      %v1155 = vpop.f32.mrb[0].mxu0
      %1156 = vmatprep.mubr.f32.mxu0 0.0
      %v1157 = vand.u32 %v426, 4294901760
      %v1158 = vsub.f32 %v426, %v1157
      %v1159 = vand.u32 %v1158, 4294901760
      %1160 = vmatmul.mubr.f32.gmra.mrb[0].mxu0 %v1159
      %v1161 = vpop.f32.mrb[0].mxu0
      %v1162 = vadd.f32 %v976, %v1161
      %v1163 = vpop.f32.mrb[0].mxu0
      %1164 = vmatprep.mubr.f32.mxu0 0.0
      %v1165 = vand.u32 %v429, 4294901760
      %v1166 = vsub.f32 %v429, %v1165
      %v1167 = vand.u32 %v1166, 4294901760
      %1168 = vmatmul.mubr.f32.gmra.mrb[0].mxu0 %v1167
      %v1169 = vpop.f32.mrb[0].mxu0
      %v1170 = vadd.f32 %v983, %v1169
      %v1171 = vpop.f32.mrb[0].mxu0
      %1172 = vmatprep.mubr.f32.mxu0 0.0
      %v1173 = vand.u32 %v432, 4294901760
      %v1174 = vsub.f32 %v432, %v1173
      %v1175 = vand.u32 %v1174, 4294901760
      %1176 = vmatmul.mubr.f32.gmra.mrb[0].mxu0 %v1175
      %v1177 = vpop.f32.mrb[0].mxu0
      %v1178 = vadd.f32 %v990, %v1177
      %v1179 = vpop.f32.mrb[0].mxu0
      %1180 = vmatprep.mubr.f32.mxu0 0.0
      %v1181 = vand.u32 %v435, 4294901760
      %v1182 = vsub.f32 %v435, %v1181
      %v1183 = vand.u32 %v1182, 4294901760
      %1184 = vmatmul.mubr.f32.gmra.mrb[0].mxu0 %v1183
      %v1185 = vpop.f32.mrb[0].mxu0
      %v1186 = vadd.f32 %v997, %v1185
      %v1187 = vpop.f32.mrb[0].mxu0
      %1188 = vmatprep.mubr.f32.mxu0 0.0
      %v1189 = vand.u32 %v438, 4294901760
      %v1190 = vsub.f32 %v438, %v1189
      %v1191 = vand.u32 %v1190, 4294901760
      %1192 = vmatmul.mubr.f32.gmra.mrb[0].mxu0 %v1191
      %v1193 = vpop.f32.mrb[0].mxu0
      %v1194 = vadd.f32 %v1004, %v1193
      %v1195 = vpop.f32.mrb[0].mxu0
      %1196 = vmatprep.mubr.f32.mxu0 0.0
      %v1197 = vand.u32 %v441, 4294901760
      %v1198 = vsub.f32 %v441, %v1197
      %v1199 = vand.u32 %v1198, 4294901760
      %1200 = vmatmul.mubr.f32.gmra.mrb[0].mxu0 %v1199
      %v1201 = vpop.f32.mrb[0].mxu0
      %v1202 = vadd.f32 %v1011, %v1201
      %v1203 = vpop.f32.mrb[0].mxu0
      %1204 = vmatprep.mubr.f32.mxu0 0.0
      %v1205 = vand.u32 %v444, 4294901760
      %v1206 = vsub.f32 %v444, %v1205
      %v1207 = vand.u32 %v1206, 4294901760
      %1208 = vmatmul.mubr.f32.gmra.mrb[0].mxu0 %v1207
      %v1209 = vpop.f32.mrb[0].mxu0
      %v1210 = vadd.f32 %v1018, %v1209
      %v1211 = vpop.f32.mrb[0].mxu0
      %1212 = vmatprep.mubr.f32.mxu0 0.0
      %v1213 = vand.u32 %v447, 4294901760
      %v1214 = vsub.f32 %v447, %v1213
      %v1215 = vand.u32 %v1214, 4294901760
      %1216 = vmatmul.mubr.f32.gmra.mrb[0].mxu0 %v1215
      %v1217 = vpop.f32.mrb[0].mxu0
      %v1218 = vadd.f32 %v1025, %v1217
      %v1219 = vpop.f32.mrb[0].mxu0
      %1220 = vmatprep.mubr.f32.mxu0 0.0
      %v1221 = vand.u32 %v450, 4294901760
      %v1222 = vsub.f32 %v450, %v1221
      %v1223 = vand.u32 %v1222, 4294901760
      %1224 = vmatmul.mubr.f32.gmra.mrb[0].mxu0 %v1223
      %v1225 = vpop.f32.mrb[0].mxu0
      %v1226 = vadd.f32 %v1032, %v1225
      %v1227 = vpop.f32.mrb[0].mxu0
      %1228 = vmatprep.mubr.f32.mxu0 0.0
      %v1229 = vand.u32 %v453, 4294901760
      %v1230 = vsub.f32 %v453, %v1229
      %v1231 = vand.u32 %v1230, 4294901760
      %1232 = vmatmul.mubr.f32.gmra.mrb[0].mxu0 %v1231
      %v1233 = vpop.f32.mrb[0].mxu0
      %v1234 = vadd.f32 %v1039, %v1233
      %v1235 = vpop.f32.mrb[0].mxu0
      %1236 = vmatprep.mubr.f32.mxu0 0.0
      %v1237 = vand.u32 %v456, 4294901760
      %v1238 = vsub.f32 %v456, %v1237
      %v1239 = vand.u32 %v1238, 4294901760
      %1240 = vmatmul.mubr.f32.gmra.mrb[0].mxu0 %v1239
      %v1241 = vpop.f32.mrb[0].mxu0
      %v1242 = vadd.f32 %v1046, %v1241
      %v1243 = vpop.f32.mrb[0].mxu0
      %1244 = vmatprep.mubr.f32.mxu0 0.0
      %v1245 = vand.u32 %v459, 4294901760
      %v1246 = vsub.f32 %v459, %v1245
      %v1247 = vand.u32 %v1246, 4294901760
      %1248 = vmatmul.mubr.f32.gmra.mrb[0].mxu0 %v1247
      %v1249 = vpop.f32.mrb[0].mxu0
      %v1250 = vadd.f32 %v1053, %v1249
      %v1251 = vpop.f32.mrb[0].mxu0
      %1252 = vdwg.mxu0
      %1253 = vmatprep.subr.mxu0 0.0
      %v1254 = vand.u32 %v403, 4294901760
      %v1255 = vsub.f32 %v403, %v1254
      %v1256 = vand.u32 %v1255, 4294901760
      %1257 = vmatpush1.msra.mxu0 %v1256
      %1258 = vmatprep.subr.mxu0 0.0
      %v1259 = vand.u32 %v404, 4294901760
      %v1260 = vsub.f32 %v404, %v1259
      %v1261 = vand.u32 %v1260, 4294901760
      %1262 = vmatpush1.msra.mxu0 %v1261
      %1263 = vmatprep.subr.mxu0 0.0
      %v1264 = vand.u32 %v405, 4294901760
      %v1265 = vsub.f32 %v405, %v1264
      %v1266 = vand.u32 %v1265, 4294901760
      %1267 = vmatpush1.msra.mxu0 %v1266
      %1268 = vmatprep.subr.mxu0 0.0
      %v1269 = vand.u32 %v406, 4294901760
      %v1270 = vsub.f32 %v406, %v1269
      %v1271 = vand.u32 %v1270, 4294901760
      %1272 = vmatpush1.msra.mxu0 %v1271
      %1273 = vmatprep.subr.mxu0 0.0
      %1274 = vmatpush1.msra.mxu0 0.0
      %1275 = vmatprep.subr.mxu0 0.0
      %1276 = vmatpush1.msra.mxu0 0.0
      %1277 = vmatprep.subr.mxu0 0.0
      %1278 = vmatpush1.msra.mxu0 0.0
      %1279 = vmatprep.subr.mxu0 0.0
      %1280 = vmatpush1.msra.mxu0 0.0
      %1281 = vmatprep.subr.mxu0 0.0
      %1282 = vmatpush1.msra.mxu0 0.0
      %1283 = vmatprep.subr.mxu0 0.0
      %1284 = vmatpush1.msra.mxu0 0.0
      %1285 = vmatprep.subr.mxu0 0.0
      %1286 = vmatpush1.msra.mxu0 0.0
      %1287 = vmatprep.subr.mxu0 0.0
      %1288 = vmatpush1.msra.mxu0 0.0
      %1289 = vmatprep.subr.mxu0 0.0
      %1290 = vmatpush1.msra.mxu0 0.0
      %1291 = vmatprep.subr.mxu0 0.0
      %1292 = vmatpush1.msra.mxu0 0.0
      %1293 = vmatprep.subr.mxu0 0.0
      %1294 = vmatpush1.msra.mxu0 0.0
      %1295 = vmatprep.subr.mxu0 0.0
      %1296 = vmatpush1.msra.mxu0 0.0
      %1297 = vmatprep.subr.mxu0 0.0
      %1298 = vmatpush1.msra.mxu0 0.0
      %1299 = vmatprep.subr.mxu0 0.0
      %1300 = vmatpush1.msra.mxu0 0.0
      %1301 = vmatprep.subr.mxu0 0.0
      %1302 = vmatpush1.msra.mxu0 0.0
      %1303 = vmatprep.subr.mxu0 0.0
      %1304 = vmatpush1.msra.mxu0 0.0
      %1305 = vmatprep.subr.mxu0 0.0
      %1306 = vmatpush1.msra.mxu0 0.0
      %1307 = vmatprep.subr.mxu0 0.0
      %1308 = vmatpush1.msra.mxu0 0.0
      %1309 = vmatprep.subr.mxu0 0.0
      %1310 = vmatpush1.msra.mxu0 0.0
      %1311 = vmatprep.subr.mxu0 0.0
      %1312 = vmatpush1.msra.mxu0 0.0
      %1313 = vmatprep.subr.mxu0 0.0
      %1314 = vmatpush1.msra.mxu0 0.0
      %1315 = vmatprep.subr.mxu0 0.0
      %1316 = vmatpush1.msra.mxu0 0.0
      %1317 = vmatprep.subr.mxu0 0.0
      %1318 = vmatpush1.msra.mxu0 0.0
      %1319 = vmatprep.subr.mxu0 0.0
      %1320 = vmatpush1.msra.mxu0 0.0
      %1321 = vmatprep.subr.mxu0 0.0
      %1322 = vmatpush1.msra.mxu0 0.0
      %1323 = vmatprep.subr.mxu0 0.0
      %1324 = vmatpush1.msra.mxu0 0.0
      %1325 = vmatprep.subr.mxu0 0.0
      %1326 = vmatpush1.msra.mxu0 0.0
      %1327 = vmatprep.subr.mxu0 0.0
      %1328 = vmatpush1.msra.mxu0 0.0
      %1329 = vmatprep.mubr.f32.mxu0 0.0
      %v1330 = vand.u32 %v414, 4294901760
      %1331 = vmatmul.mubr.f32.gmra.mrb[0].mxu0 %v1330
      %v1332 = vpop.f32.mrb[0].mxu0
      %v1333 = vadd.f32 %v1130, %v1332
      %v1334 = vpop.f32.mrb[0].mxu0
      %1335 = vmatprep.mubr.f32.mxu0 0.0
      %v1336 = vand.u32 %v417, 4294901760
      %1337 = vmatmul.mubr.f32.gmra.mrb[0].mxu0 %v1336
      %v1338 = vpop.f32.mrb[0].mxu0
      %v1339 = vadd.f32 %v1138, %v1338
      %v1340 = vpop.f32.mrb[0].mxu0
      %1341 = vmatprep.mubr.f32.mxu0 0.0
      %v1342 = vand.u32 %v420, 4294901760
      %1343 = vmatmul.mubr.f32.gmra.mrb[0].mxu0 %v1342
      %v1344 = vpop.f32.mrb[0].mxu0
      %v1345 = vadd.f32 %v1146, %v1344
      %v1346 = vpop.f32.mrb[0].mxu0
      %1347 = vmatprep.mubr.f32.mxu0 0.0
      %v1348 = vand.u32 %v423, 4294901760
      %1349 = vmatmul.mubr.f32.gmra.mrb[0].mxu0 %v1348
      %v1350 = vpop.f32.mrb[0].mxu0
      %v1351 = vadd.f32 %v1154, %v1350
      %v1352 = vpop.f32.mrb[0].mxu0
      %1353 = vmatprep.mubr.f32.mxu0 0.0
      %v1354 = vand.u32 %v426, 4294901760
      %1355 = vmatmul.mubr.f32.gmra.mrb[0].mxu0 %v1354
      %v1356 = vpop.f32.mrb[0].mxu0
      %v1357 = vadd.f32 %v1162, %v1356
      %v1358 = vpop.f32.mrb[0].mxu0
      %1359 = vmatprep.mubr.f32.mxu0 0.0
      %v1360 = vand.u32 %v429, 4294901760
      %1361 = vmatmul.mubr.f32.gmra.mrb[0].mxu0 %v1360
      %v1362 = vpop.f32.mrb[0].mxu0
      %v1363 = vadd.f32 %v1170, %v1362
      %v1364 = vpop.f32.mrb[0].mxu0
      %1365 = vmatprep.mubr.f32.mxu0 0.0
      %v1366 = vand.u32 %v432, 4294901760
      %1367 = vmatmul.mubr.f32.gmra.mrb[0].mxu0 %v1366
      %v1368 = vpop.f32.mrb[0].mxu0
      %v1369 = vadd.f32 %v1178, %v1368
      %v1370 = vpop.f32.mrb[0].mxu0
      %1371 = vmatprep.mubr.f32.mxu0 0.0
      %v1372 = vand.u32 %v435, 4294901760
      %1373 = vmatmul.mubr.f32.gmra.mrb[0].mxu0 %v1372
      %v1374 = vpop.f32.mrb[0].mxu0
      %v1375 = vadd.f32 %v1186, %v1374
      %v1376 = vpop.f32.mrb[0].mxu0
      %1377 = vmatprep.mubr.f32.mxu0 0.0
      %v1378 = vand.u32 %v438, 4294901760
      %1379 = vmatmul.mubr.f32.gmra.mrb[0].mxu0 %v1378
      %v1380 = vpop.f32.mrb[0].mxu0
      %v1381 = vadd.f32 %v1194, %v1380
      %v1382 = vpop.f32.mrb[0].mxu0
      %1383 = vmatprep.mubr.f32.mxu0 0.0
      %v1384 = vand.u32 %v441, 4294901760
      %1385 = vmatmul.mubr.f32.gmra.mrb[0].mxu0 %v1384
      %v1386 = vpop.f32.mrb[0].mxu0
      %v1387 = vadd.f32 %v1202, %v1386
      %v1388 = vpop.f32.mrb[0].mxu0
      %1389 = vmatprep.mubr.f32.mxu0 0.0
      %v1390 = vand.u32 %v444, 4294901760
      %1391 = vmatmul.mubr.f32.gmra.mrb[0].mxu0 %v1390
      %v1392 = vpop.f32.mrb[0].mxu0
      %v1393 = vadd.f32 %v1210, %v1392
      %v1394 = vpop.f32.mrb[0].mxu0
      %1395 = vmatprep.mubr.f32.mxu0 0.0
      %v1396 = vand.u32 %v447, 4294901760
      %1397 = vmatmul.mubr.f32.gmra.mrb[0].mxu0 %v1396
      %v1398 = vpop.f32.mrb[0].mxu0
      %v1399 = vadd.f32 %v1218, %v1398
      %v1400 = vpop.f32.mrb[0].mxu0
      %1401 = vmatprep.mubr.f32.mxu0 0.0
      %v1402 = vand.u32 %v450, 4294901760
      %1403 = vmatmul.mubr.f32.gmra.mrb[0].mxu0 %v1402
      %v1404 = vpop.f32.mrb[0].mxu0
      %v1405 = vadd.f32 %v1226, %v1404
      %v1406 = vpop.f32.mrb[0].mxu0
      %1407 = vmatprep.mubr.f32.mxu0 0.0
      %v1408 = vand.u32 %v453, 4294901760
      %1409 = vmatmul.mubr.f32.gmra.mrb[0].mxu0 %v1408
      %v1410 = vpop.f32.mrb[0].mxu0
      %v1411 = vadd.f32 %v1234, %v1410
      %v1412 = vpop.f32.mrb[0].mxu0
      %1413 = vmatprep.mubr.f32.mxu0 0.0
      %v1414 = vand.u32 %v456, 4294901760
      %1415 = vmatmul.mubr.f32.gmra.mrb[0].mxu0 %v1414
      %v1416 = vpop.f32.mrb[0].mxu0
      %v1417 = vadd.f32 %v1242, %v1416
      %v1418 = vpop.f32.mrb[0].mxu0
      %1419 = vmatprep.mubr.f32.mxu0 0.0
      %v1420 = vand.u32 %v459, 4294901760
      %1421 = vmatmul.mubr.f32.gmra.mrb[0].mxu0 %v1420
      %v1422 = vpop.f32.mrb[0].mxu0
      %v1423 = vadd.f32 %v1250, %v1422
      %v1424 = vpop.f32.mrb[0].mxu0
      %1425 = vdwg.mxu0
      %1426 = vmatprep.subr.mxu0 0.0
      %v1427 = vand.u32 %v403, 4294901760
      %1428 = vmatpush1.msra.mxu0 %v1427
      %1429 = vmatprep.subr.mxu0 0.0
      %v1430 = vand.u32 %v404, 4294901760
      %1431 = vmatpush1.msra.mxu0 %v1430
      %1432 = vmatprep.subr.mxu0 0.0
      %v1433 = vand.u32 %v405, 4294901760
      %1434 = vmatpush1.msra.mxu0 %v1433
      %1435 = vmatprep.subr.mxu0 0.0
      %v1436 = vand.u32 %v406, 4294901760
      %1437 = vmatpush1.msra.mxu0 %v1436
      %1438 = vmatprep.subr.mxu0 0.0
      %1439 = vmatpush1.msra.mxu0 0.0
      %1440 = vmatprep.subr.mxu0 0.0
      %1441 = vmatpush1.msra.mxu0 0.0
      %1442 = vmatprep.subr.mxu0 0.0
      %1443 = vmatpush1.msra.mxu0 0.0
      %1444 = vmatprep.subr.mxu0 0.0
      %1445 = vmatpush1.msra.mxu0 0.0
      %1446 = vmatprep.subr.mxu0 0.0
      %1447 = vmatpush1.msra.mxu0 0.0
      %1448 = vmatprep.subr.mxu0 0.0
      %1449 = vmatpush1.msra.mxu0 0.0
      %1450 = vmatprep.subr.mxu0 0.0
      %1451 = vmatpush1.msra.mxu0 0.0
      %1452 = vmatprep.subr.mxu0 0.0
      %1453 = vmatpush1.msra.mxu0 0.0
      %1454 = vmatprep.subr.mxu0 0.0
      %1455 = vmatpush1.msra.mxu0 0.0
      %1456 = vmatprep.subr.mxu0 0.0
      %1457 = vmatpush1.msra.mxu0 0.0
      %1458 = vmatprep.subr.mxu0 0.0
      %1459 = vmatpush1.msra.mxu0 0.0
      %1460 = vmatprep.subr.mxu0 0.0
      %1461 = vmatpush1.msra.mxu0 0.0
      %1462 = vmatprep.subr.mxu0 0.0
      %1463 = vmatpush1.msra.mxu0 0.0
      %1464 = vmatprep.subr.mxu0 0.0
      %1465 = vmatpush1.msra.mxu0 0.0
      %1466 = vmatprep.subr.mxu0 0.0
      %1467 = vmatpush1.msra.mxu0 0.0
      %1468 = vmatprep.subr.mxu0 0.0
      %1469 = vmatpush1.msra.mxu0 0.0
      %1470 = vmatprep.subr.mxu0 0.0
      %1471 = vmatpush1.msra.mxu0 0.0
      %1472 = vmatprep.subr.mxu0 0.0
      %1473 = vmatpush1.msra.mxu0 0.0
      %1474 = vmatprep.subr.mxu0 0.0
      %1475 = vmatpush1.msra.mxu0 0.0
      %1476 = vmatprep.subr.mxu0 0.0
      %1477 = vmatpush1.msra.mxu0 0.0
      %1478 = vmatprep.subr.mxu0 0.0
      %1479 = vmatpush1.msra.mxu0 0.0
      %1480 = vmatprep.subr.mxu0 0.0
      %1481 = vmatpush1.msra.mxu0 0.0
      %1482 = vmatprep.subr.mxu0 0.0
      %1483 = vmatpush1.msra.mxu0 0.0
      %1484 = vmatprep.subr.mxu0 0.0
      %1485 = vmatpush1.msra.mxu0 0.0
      %1486 = vmatprep.subr.mxu0 0.0
      %1487 = vmatpush1.msra.mxu0 0.0
      %1488 = vmatprep.subr.mxu0 0.0
      %1489 = vmatpush1.msra.mxu0 0.0
      %1490 = vmatprep.subr.mxu0 0.0
      %1491 = vmatpush1.msra.mxu0 0.0
      %1492 = vmatprep.subr.mxu0 0.0
      %1493 = vmatpush1.msra.mxu0 0.0
      %1494 = vmatprep.mubr.f32.mxu0 0.0
      %v1495 = vand.u32 %v414, 4294901760
      %1496 = vmatmul.mubr.f32.gmra.mrb[0].mxu0 %v1495
      %v1497 = vpop.f32.mrb[0].mxu0
      %v1498 = vadd.f32 %v1333, %v1497
      %v1499 = vpop.f32.mrb[0].mxu0
      %1500 = vmatprep.mubr.f32.mxu0 0.0
      %v1501 = vand.u32 %v417, 4294901760
      %1502 = vmatmul.mubr.f32.gmra.mrb[0].mxu0 %v1501
      %v1503 = vpop.f32.mrb[0].mxu0
      %v1504 = vadd.f32 %v1339, %v1503
      %v1505 = vpop.f32.mrb[0].mxu0
      %1506 = vmatprep.mubr.f32.mxu0 0.0
      %v1507 = vand.u32 %v420, 4294901760
      %1508 = vmatmul.mubr.f32.gmra.mrb[0].mxu0 %v1507
      %v1509 = vpop.f32.mrb[0].mxu0
      %v1510 = vadd.f32 %v1345, %v1509
      %v1511 = vpop.f32.mrb[0].mxu0
      %1512 = vmatprep.mubr.f32.mxu0 0.0
      %v1513 = vand.u32 %v423, 4294901760
      %1514 = vmatmul.mubr.f32.gmra.mrb[0].mxu0 %v1513
      %v1515 = vpop.f32.mrb[0].mxu0
      %v1516 = vadd.f32 %v1351, %v1515
      %v1517 = vpop.f32.mrb[0].mxu0
      %1518 = vmatprep.mubr.f32.mxu0 0.0
      %v1519 = vand.u32 %v426, 4294901760
      %1520 = vmatmul.mubr.f32.gmra.mrb[0].mxu0 %v1519
      %v1521 = vpop.f32.mrb[0].mxu0
      %v1522 = vadd.f32 %v1357, %v1521
      %v1523 = vpop.f32.mrb[0].mxu0
      %1524 = vmatprep.mubr.f32.mxu0 0.0
      %v1525 = vand.u32 %v429, 4294901760
      %1526 = vmatmul.mubr.f32.gmra.mrb[0].mxu0 %v1525
      %v1527 = vpop.f32.mrb[0].mxu0
      %v1528 = vadd.f32 %v1363, %v1527
      %v1529 = vpop.f32.mrb[0].mxu0
      %1530 = vmatprep.mubr.f32.mxu0 0.0
      %v1531 = vand.u32 %v432, 4294901760
      %1532 = vmatmul.mubr.f32.gmra.mrb[0].mxu0 %v1531
      %v1533 = vpop.f32.mrb[0].mxu0
      %v1534 = vadd.f32 %v1369, %v1533
      %v1535 = vpop.f32.mrb[0].mxu0
      %1536 = vmatprep.mubr.f32.mxu0 0.0
      %v1537 = vand.u32 %v435, 4294901760
      %1538 = vmatmul.mubr.f32.gmra.mrb[0].mxu0 %v1537
      %v1539 = vpop.f32.mrb[0].mxu0
      %v1540 = vadd.f32 %v1375, %v1539
      %v1541 = vpop.f32.mrb[0].mxu0
      %1542 = vmatprep.mubr.f32.mxu0 0.0
      %v1543 = vand.u32 %v438, 4294901760
      %1544 = vmatmul.mubr.f32.gmra.mrb[0].mxu0 %v1543
      %v1545 = vpop.f32.mrb[0].mxu0
      %v1546 = vadd.f32 %v1381, %v1545
      %v1547 = vpop.f32.mrb[0].mxu0
      %1548 = vmatprep.mubr.f32.mxu0 0.0
      %v1549 = vand.u32 %v441, 4294901760
      %1550 = vmatmul.mubr.f32.gmra.mrb[0].mxu0 %v1549
      %v1551 = vpop.f32.mrb[0].mxu0
      %v1552 = vadd.f32 %v1387, %v1551
      %v1553 = vpop.f32.mrb[0].mxu0
      %1554 = vmatprep.mubr.f32.mxu0 0.0
      %v1555 = vand.u32 %v444, 4294901760
      %1556 = vmatmul.mubr.f32.gmra.mrb[0].mxu0 %v1555
      %v1557 = vpop.f32.mrb[0].mxu0
      %v1558 = vadd.f32 %v1393, %v1557
      %v1559 = vpop.f32.mrb[0].mxu0
      %1560 = vmatprep.mubr.f32.mxu0 0.0
      %v1561 = vand.u32 %v447, 4294901760
      %1562 = vmatmul.mubr.f32.gmra.mrb[0].mxu0 %v1561
      %v1563 = vpop.f32.mrb[0].mxu0
      %v1564 = vadd.f32 %v1399, %v1563
      %v1565 = vpop.f32.mrb[0].mxu0
      %1566 = vmatprep.mubr.f32.mxu0 0.0
      %v1567 = vand.u32 %v450, 4294901760
      %1568 = vmatmul.mubr.f32.gmra.mrb[0].mxu0 %v1567
      %v1569 = vpop.f32.mrb[0].mxu0
      %v1570 = vadd.f32 %v1405, %v1569
      %v1571 = vpop.f32.mrb[0].mxu0
      %1572 = vmatprep.mubr.f32.mxu0 0.0
      %v1573 = vand.u32 %v453, 4294901760
      %1574 = vmatmul.mubr.f32.gmra.mrb[0].mxu0 %v1573
      %v1575 = vpop.f32.mrb[0].mxu0
      %v1576 = vadd.f32 %v1411, %v1575
      %v1577 = vpop.f32.mrb[0].mxu0
      %1578 = vmatprep.mubr.f32.mxu0 0.0
      %v1579 = vand.u32 %v456, 4294901760
      %1580 = vmatmul.mubr.f32.gmra.mrb[0].mxu0 %v1579
      %v1581 = vpop.f32.mrb[0].mxu0
      %v1582 = vadd.f32 %v1417, %v1581
      %v1583 = vpop.f32.mrb[0].mxu0
      %1584 = vmatprep.mubr.f32.mxu0 0.0
      %v1585 = vand.u32 %v459, 4294901760
      %1586 = vmatmul.mubr.f32.gmra.mrb[0].mxu0 %v1585
      %v1587 = vpop.f32.mrb[0].mxu0
      %v1588 = vadd.f32 %v1423, %v1587
      %v1589 = vpop.f32.mrb[0].mxu0
      %1590 = vdwg.mxu0
      %v1591 = vmax.f32 %v1498, 0.0
      %v1592 = vmax.f32 %v1504, 0.0
      %v1593 = vmax.f32 %v1510, 0.0
      %v1594 = vmax.f32 %v1516, 0.0
      %v1595 = vmax.f32 %v1522, 0.0
      %v1596 = vmax.f32 %v1528, 0.0
      %v1597 = vmax.f32 %v1534, 0.0
      %v1598 = vmax.f32 %v1540, 0.0
      %v1599 = vmax.f32 %v1546, 0.0
      %v1600 = vmax.f32 %v1552, 0.0
      %v1601 = vmax.f32 %v1558, 0.0
      %v1602 = vmax.f32 %v1564, 0.0
      %v1603 = vmax.f32 %v1570, 0.0
      %v1604 = vmax.f32 %v1576, 0.0
      %v1605 = vmax.f32 %v1582, 0.0
      %v1606 = vmax.f32 %v1588, 0.0
      %s1607 = scalar_lea.vmem %s1, 80
      %v1608 = vld [vmem:[%s1607] sm:$0xff]
      %v1609 = vld [vmem:[%s1607 + $0x8] sm:$0xff]
      %v1610 = vld [vmem:[%s1607 + $0x10] sm:$0xff]
      %v1611 = vld [vmem:[%s1607 + $0x18] sm:$0xff]
      %v1612 = vld [vmem:[%s1607 + $0x20] sm:$0x1]
      %v1613 = vlaneseq
      %v1614 = vshrl.u32 %v1613, 7
      %v1615 = vsub.s32 0, %v1614
      %v1616 = vrot.slane %v1612, %v1615
      %v1618 = vsel %vm412, %v1591, 0
      %v1621 = vsel %vm412, %v1592, 0
      %v1624 = vsel %vm412, %v1593, 0
      %v1627 = vsel %vm412, %v1594, 0
      %v1630 = vsel %vm412, %v1595, 0
      %v1633 = vsel %vm412, %v1596, 0
      %v1636 = vsel %vm412, %v1597, 0
      %v1639 = vsel %vm412, %v1598, 0
      %v1642 = vsel %vm412, %v1599, 0
      %v1645 = vsel %vm412, %v1600, 0
      %v1648 = vsel %vm412, %v1601, 0
      %v1651 = vsel %vm412, %v1602, 0
      %v1654 = vsel %vm412, %v1603, 0
      %v1657 = vsel %vm412, %v1604, 0
      %v1660 = vsel %vm412, %v1605, 0
      %v1663 = vsel %vm412, %v1606, 0
      %1665 = vmatprep.subr.mxu0 0.0
      %v1666 = vand.u32 %v1608, 4294901760
      %1667 = vmatpush1.msra.mxu0 %v1666
      %1668 = vmatprep.subr.mxu0 0.0
      %v1669 = vand.u32 %v1609, 4294901760
      %1670 = vmatpush1.msra.mxu0 %v1669
      %1671 = vmatprep.subr.mxu0 0.0
      %v1672 = vand.u32 %v1610, 4294901760
      %1673 = vmatpush1.msra.mxu0 %v1672
      %1674 = vmatprep.subr.mxu0 0.0
      %v1675 = vand.u32 %v1611, 4294901760
      %1676 = vmatpush1.msra.mxu0 %v1675
      %1677 = vmatprep.subr.mxu0 0.0
      %1678 = vmatpush1.msra.mxu0 0.0
      %1679 = vmatprep.subr.mxu0 0.0
      %1680 = vmatpush1.msra.mxu0 0.0
      %1681 = vmatprep.subr.mxu0 0.0
      %1682 = vmatpush1.msra.mxu0 0.0
      %1683 = vmatprep.subr.mxu0 0.0
      %1684 = vmatpush1.msra.mxu0 0.0
      %1685 = vmatprep.subr.mxu0 0.0
      %1686 = vmatpush1.msra.mxu0 0.0
      %1687 = vmatprep.subr.mxu0 0.0
      %1688 = vmatpush1.msra.mxu0 0.0
      %1689 = vmatprep.subr.mxu0 0.0
      %1690 = vmatpush1.msra.mxu0 0.0
      %1691 = vmatprep.subr.mxu0 0.0
      %1692 = vmatpush1.msra.mxu0 0.0
      %1693 = vmatprep.subr.mxu0 0.0
      %1694 = vmatpush1.msra.mxu0 0.0
      %1695 = vmatprep.subr.mxu0 0.0
      %1696 = vmatpush1.msra.mxu0 0.0
      %1697 = vmatprep.subr.mxu0 0.0
      %1698 = vmatpush1.msra.mxu0 0.0
      %1699 = vmatprep.subr.mxu0 0.0
      %1700 = vmatpush1.msra.mxu0 0.0
      %1701 = vmatprep.subr.mxu0 0.0
      %1702 = vmatpush1.msra.mxu0 0.0
      %1703 = vmatprep.subr.mxu0 0.0
      %1704 = vmatpush1.msra.mxu0 0.0
      %1705 = vmatprep.subr.mxu0 0.0
      %1706 = vmatpush1.msra.mxu0 0.0
      %1707 = vmatprep.subr.mxu0 0.0
      %1708 = vmatpush1.msra.mxu0 0.0
      %1709 = vmatprep.subr.mxu0 0.0
      %1710 = vmatpush1.msra.mxu0 0.0
      %1711 = vmatprep.subr.mxu0 0.0
      %1712 = vmatpush1.msra.mxu0 0.0
      %1713 = vmatprep.subr.mxu0 0.0
      %1714 = vmatpush1.msra.mxu0 0.0
      %1715 = vmatprep.subr.mxu0 0.0
      %1716 = vmatpush1.msra.mxu0 0.0
      %1717 = vmatprep.subr.mxu0 0.0
      %1718 = vmatpush1.msra.mxu0 0.0
      %1719 = vmatprep.subr.mxu0 0.0
      %1720 = vmatpush1.msra.mxu0 0.0
      %1721 = vmatprep.subr.mxu0 0.0
      %1722 = vmatpush1.msra.mxu0 0.0
      %1723 = vmatprep.subr.mxu0 0.0
      %1724 = vmatpush1.msra.mxu0 0.0
      %1725 = vmatprep.subr.mxu0 0.0
      %1726 = vmatpush1.msra.mxu0 0.0
      %1727 = vmatprep.subr.mxu0 0.0
      %1728 = vmatpush1.msra.mxu0 0.0
      %1729 = vmatprep.subr.mxu0 0.0
      %1730 = vmatpush1.msra.mxu0 0.0
      %1731 = vmatprep.subr.mxu0 0.0
      %1732 = vmatpush1.msra.mxu0 0.0
      %1733 = vmatprep.mubr.f32.mxu0 0.0
      %v1734 = vand.u32 %v1618, 4294901760
      %v1735 = vsub.f32 %v1618, %v1734
      %v1736 = vand.u32 %v1735, 4294901760
      %v1737 = vsub.f32 %v1735, %v1736
      %v1738 = vand.u32 %v1737, 4294901760
      %1739 = vmatmul.mubr.f32.gmra.mrb[0].mxu0 %v1738
      %v1740 = vpop.f32.mrb[0].mxu0
      %v1741 = vadd.f32 %v1616, %v1740
      %v1742 = vpop.f32.mrb[0].mxu0
      %1743 = vmatprep.mubr.f32.mxu0 0.0
      %v1744 = vand.u32 %v1621, 4294901760
      %v1745 = vsub.f32 %v1621, %v1744
      %v1746 = vand.u32 %v1745, 4294901760
      %v1747 = vsub.f32 %v1745, %v1746
      %v1748 = vand.u32 %v1747, 4294901760
      %1749 = vmatmul.mubr.f32.gmra.mrb[0].mxu0 %v1748
      %v1750 = vpop.f32.mrb[0].mxu0
      %v1751 = vadd.f32 %v1616, %v1750
      %v1752 = vpop.f32.mrb[0].mxu0
      %1753 = vmatprep.mubr.f32.mxu0 0.0
      %v1754 = vand.u32 %v1624, 4294901760
      %v1755 = vsub.f32 %v1624, %v1754
      %v1756 = vand.u32 %v1755, 4294901760
      %v1757 = vsub.f32 %v1755, %v1756
      %v1758 = vand.u32 %v1757, 4294901760
      %1759 = vmatmul.mubr.f32.gmra.mrb[0].mxu0 %v1758
      %v1760 = vpop.f32.mrb[0].mxu0
      %v1761 = vadd.f32 %v1616, %v1760
      %v1762 = vpop.f32.mrb[0].mxu0
      %1763 = vmatprep.mubr.f32.mxu0 0.0
      %v1764 = vand.u32 %v1627, 4294901760
      %v1765 = vsub.f32 %v1627, %v1764
      %v1766 = vand.u32 %v1765, 4294901760
      %v1767 = vsub.f32 %v1765, %v1766
      %v1768 = vand.u32 %v1767, 4294901760
      %1769 = vmatmul.mubr.f32.gmra.mrb[0].mxu0 %v1768
      %v1770 = vpop.f32.mrb[0].mxu0
      %v1771 = vadd.f32 %v1616, %v1770
      %v1772 = vpop.f32.mrb[0].mxu0
      %1773 = vmatprep.mubr.f32.mxu0 0.0
      %v1774 = vand.u32 %v1630, 4294901760
      %v1775 = vsub.f32 %v1630, %v1774
      %v1776 = vand.u32 %v1775, 4294901760
      %v1777 = vsub.f32 %v1775, %v1776
      %v1778 = vand.u32 %v1777, 4294901760
      %1779 = vmatmul.mubr.f32.gmra.mrb[0].mxu0 %v1778
      %v1780 = vpop.f32.mrb[0].mxu0
      %v1781 = vadd.f32 %v1616, %v1780
      %v1782 = vpop.f32.mrb[0].mxu0
      %1783 = vmatprep.mubr.f32.mxu0 0.0
      %v1784 = vand.u32 %v1633, 4294901760
      %v1785 = vsub.f32 %v1633, %v1784
      %v1786 = vand.u32 %v1785, 4294901760
      %v1787 = vsub.f32 %v1785, %v1786
      %v1788 = vand.u32 %v1787, 4294901760
      %1789 = vmatmul.mubr.f32.gmra.mrb[0].mxu0 %v1788
      %v1790 = vpop.f32.mrb[0].mxu0
      %v1791 = vadd.f32 %v1616, %v1790
      %v1792 = vpop.f32.mrb[0].mxu0
      %1793 = vmatprep.mubr.f32.mxu0 0.0
      %v1794 = vand.u32 %v1636, 4294901760
      %v1795 = vsub.f32 %v1636, %v1794
      %v1796 = vand.u32 %v1795, 4294901760
      %v1797 = vsub.f32 %v1795, %v1796
      %v1798 = vand.u32 %v1797, 4294901760
      %1799 = vmatmul.mubr.f32.gmra.mrb[0].mxu0 %v1798
      %v1800 = vpop.f32.mrb[0].mxu0
      %v1801 = vadd.f32 %v1616, %v1800
      %v1802 = vpop.f32.mrb[0].mxu0
      %1803 = vmatprep.mubr.f32.mxu0 0.0
      %v1804 = vand.u32 %v1639, 4294901760
      %v1805 = vsub.f32 %v1639, %v1804
      %v1806 = vand.u32 %v1805, 4294901760
      %v1807 = vsub.f32 %v1805, %v1806
      %v1808 = vand.u32 %v1807, 4294901760
      %1809 = vmatmul.mubr.f32.gmra.mrb[0].mxu0 %v1808
      %v1810 = vpop.f32.mrb[0].mxu0
      %v1811 = vadd.f32 %v1616, %v1810
      %v1812 = vpop.f32.mrb[0].mxu0
      %1813 = vmatprep.mubr.f32.mxu0 0.0
      %v1814 = vand.u32 %v1642, 4294901760
      %v1815 = vsub.f32 %v1642, %v1814
      %v1816 = vand.u32 %v1815, 4294901760
      %v1817 = vsub.f32 %v1815, %v1816
      %v1818 = vand.u32 %v1817, 4294901760
      %1819 = vmatmul.mubr.f32.gmra.mrb[0].mxu0 %v1818
      %v1820 = vpop.f32.mrb[0].mxu0
      %v1821 = vadd.f32 %v1616, %v1820
      %v1822 = vpop.f32.mrb[0].mxu0
      %1823 = vmatprep.mubr.f32.mxu0 0.0
      %v1824 = vand.u32 %v1645, 4294901760
      %v1825 = vsub.f32 %v1645, %v1824
      %v1826 = vand.u32 %v1825, 4294901760
      %v1827 = vsub.f32 %v1825, %v1826
      %v1828 = vand.u32 %v1827, 4294901760
      %1829 = vmatmul.mubr.f32.gmra.mrb[0].mxu0 %v1828
      %v1830 = vpop.f32.mrb[0].mxu0
      %v1831 = vadd.f32 %v1616, %v1830
      %v1832 = vpop.f32.mrb[0].mxu0
      %1833 = vmatprep.mubr.f32.mxu0 0.0
      %v1834 = vand.u32 %v1648, 4294901760
      %v1835 = vsub.f32 %v1648, %v1834
      %v1836 = vand.u32 %v1835, 4294901760
      %v1837 = vsub.f32 %v1835, %v1836
      %v1838 = vand.u32 %v1837, 4294901760
      %1839 = vmatmul.mubr.f32.gmra.mrb[0].mxu0 %v1838
      %v1840 = vpop.f32.mrb[0].mxu0
      %v1841 = vadd.f32 %v1616, %v1840
      %v1842 = vpop.f32.mrb[0].mxu0
      %1843 = vmatprep.mubr.f32.mxu0 0.0
      %v1844 = vand.u32 %v1651, 4294901760
      %v1845 = vsub.f32 %v1651, %v1844
      %v1846 = vand.u32 %v1845, 4294901760
      %v1847 = vsub.f32 %v1845, %v1846
      %v1848 = vand.u32 %v1847, 4294901760
      %1849 = vmatmul.mubr.f32.gmra.mrb[0].mxu0 %v1848
      %v1850 = vpop.f32.mrb[0].mxu0
      %v1851 = vadd.f32 %v1616, %v1850
      %v1852 = vpop.f32.mrb[0].mxu0
      %1853 = vmatprep.mubr.f32.mxu0 0.0
      %v1854 = vand.u32 %v1654, 4294901760
      %v1855 = vsub.f32 %v1654, %v1854
      %v1856 = vand.u32 %v1855, 4294901760
      %v1857 = vsub.f32 %v1855, %v1856
      %v1858 = vand.u32 %v1857, 4294901760
      %1859 = vmatmul.mubr.f32.gmra.mrb[0].mxu0 %v1858
      %v1860 = vpop.f32.mrb[0].mxu0
      %v1861 = vadd.f32 %v1616, %v1860
      %v1862 = vpop.f32.mrb[0].mxu0
      %1863 = vmatprep.mubr.f32.mxu0 0.0
      %v1864 = vand.u32 %v1657, 4294901760
      %v1865 = vsub.f32 %v1657, %v1864
      %v1866 = vand.u32 %v1865, 4294901760
      %v1867 = vsub.f32 %v1865, %v1866
      %v1868 = vand.u32 %v1867, 4294901760
      %1869 = vmatmul.mubr.f32.gmra.mrb[0].mxu0 %v1868
      %v1870 = vpop.f32.mrb[0].mxu0
      %v1871 = vadd.f32 %v1616, %v1870
      %v1872 = vpop.f32.mrb[0].mxu0
      %1873 = vmatprep.mubr.f32.mxu0 0.0
      %v1874 = vand.u32 %v1660, 4294901760
      %v1875 = vsub.f32 %v1660, %v1874
      %v1876 = vand.u32 %v1875, 4294901760
      %v1877 = vsub.f32 %v1875, %v1876
      %v1878 = vand.u32 %v1877, 4294901760
      %1879 = vmatmul.mubr.f32.gmra.mrb[0].mxu0 %v1878
      %v1880 = vpop.f32.mrb[0].mxu0
      %v1881 = vadd.f32 %v1616, %v1880
      %v1882 = vpop.f32.mrb[0].mxu0
      %1883 = vmatprep.mubr.f32.mxu0 0.0
      %v1884 = vand.u32 %v1663, 4294901760
      %v1885 = vsub.f32 %v1663, %v1884
      %v1886 = vand.u32 %v1885, 4294901760
      %v1887 = vsub.f32 %v1885, %v1886
      %v1888 = vand.u32 %v1887, 4294901760
      %1889 = vmatmul.mubr.f32.gmra.mrb[0].mxu0 %v1888
      %v1890 = vpop.f32.mrb[0].mxu0
      %v1891 = vadd.f32 %v1616, %v1890
      %v1892 = vpop.f32.mrb[0].mxu0
      %1893 = vdwg.mxu0
      %1894 = vmatprep.subr.mxu0 0.0
      %v1895 = vand.u32 %v1608, 4294901760
      %v1896 = vsub.f32 %v1608, %v1895
      %v1897 = vand.u32 %v1896, 4294901760
      %v1898 = vsub.f32 %v1896, %v1897
      %v1899 = vand.u32 %v1898, 4294901760
      %1900 = vmatpush1.msra.mxu0 %v1899
      %1901 = vmatprep.subr.mxu0 0.0
      %v1902 = vand.u32 %v1609, 4294901760
      %v1903 = vsub.f32 %v1609, %v1902
      %v1904 = vand.u32 %v1903, 4294901760
      %v1905 = vsub.f32 %v1903, %v1904
      %v1906 = vand.u32 %v1905, 4294901760
      %1907 = vmatpush1.msra.mxu0 %v1906
      %1908 = vmatprep.subr.mxu0 0.0
      %v1909 = vand.u32 %v1610, 4294901760
      %v1910 = vsub.f32 %v1610, %v1909
      %v1911 = vand.u32 %v1910, 4294901760
      %v1912 = vsub.f32 %v1910, %v1911
      %v1913 = vand.u32 %v1912, 4294901760
      %1914 = vmatpush1.msra.mxu0 %v1913
      %1915 = vmatprep.subr.mxu0 0.0
      %v1916 = vand.u32 %v1611, 4294901760
      %v1917 = vsub.f32 %v1611, %v1916
      %v1918 = vand.u32 %v1917, 4294901760
      %v1919 = vsub.f32 %v1917, %v1918
      %v1920 = vand.u32 %v1919, 4294901760
      %1921 = vmatpush1.msra.mxu0 %v1920
      %1922 = vmatprep.subr.mxu0 0.0
      %1923 = vmatpush1.msra.mxu0 0.0
      %1924 = vmatprep.subr.mxu0 0.0
      %1925 = vmatpush1.msra.mxu0 0.0
      %1926 = vmatprep.subr.mxu0 0.0
      %1927 = vmatpush1.msra.mxu0 0.0
      %1928 = vmatprep.subr.mxu0 0.0
      %1929 = vmatpush1.msra.mxu0 0.0
      %1930 = vmatprep.subr.mxu0 0.0
      %1931 = vmatpush1.msra.mxu0 0.0
      %1932 = vmatprep.subr.mxu0 0.0
      %1933 = vmatpush1.msra.mxu0 0.0
      %1934 = vmatprep.subr.mxu0 0.0
      %1935 = vmatpush1.msra.mxu0 0.0
      %1936 = vmatprep.subr.mxu0 0.0
      %1937 = vmatpush1.msra.mxu0 0.0
      %1938 = vmatprep.subr.mxu0 0.0
      %1939 = vmatpush1.msra.mxu0 0.0
      %1940 = vmatprep.subr.mxu0 0.0
      %1941 = vmatpush1.msra.mxu0 0.0
      %1942 = vmatprep.subr.mxu0 0.0
      %1943 = vmatpush1.msra.mxu0 0.0
      %1944 = vmatprep.subr.mxu0 0.0
      %1945 = vmatpush1.msra.mxu0 0.0
      %1946 = vmatprep.subr.mxu0 0.0
      %1947 = vmatpush1.msra.mxu0 0.0
      %1948 = vmatprep.subr.mxu0 0.0
      %1949 = vmatpush1.msra.mxu0 0.0
      %1950 = vmatprep.subr.mxu0 0.0
      %1951 = vmatpush1.msra.mxu0 0.0
      %1952 = vmatprep.subr.mxu0 0.0
      %1953 = vmatpush1.msra.mxu0 0.0
      %1954 = vmatprep.subr.mxu0 0.0
      %1955 = vmatpush1.msra.mxu0 0.0
      %1956 = vmatprep.subr.mxu0 0.0
      %1957 = vmatpush1.msra.mxu0 0.0
      %1958 = vmatprep.subr.mxu0 0.0
      %1959 = vmatpush1.msra.mxu0 0.0
      %1960 = vmatprep.subr.mxu0 0.0
      %1961 = vmatpush1.msra.mxu0 0.0
      %1962 = vmatprep.subr.mxu0 0.0
      %1963 = vmatpush1.msra.mxu0 0.0
      %1964 = vmatprep.subr.mxu0 0.0
      %1965 = vmatpush1.msra.mxu0 0.0
      %1966 = vmatprep.subr.mxu0 0.0
      %1967 = vmatpush1.msra.mxu0 0.0
      %1968 = vmatprep.subr.mxu0 0.0
      %1969 = vmatpush1.msra.mxu0 0.0
      %1970 = vmatprep.subr.mxu0 0.0
      %1971 = vmatpush1.msra.mxu0 0.0
      %1972 = vmatprep.subr.mxu0 0.0
      %1973 = vmatpush1.msra.mxu0 0.0
      %1974 = vmatprep.subr.mxu0 0.0
      %1975 = vmatpush1.msra.mxu0 0.0
      %1976 = vmatprep.subr.mxu0 0.0
      %1977 = vmatpush1.msra.mxu0 0.0
      %1978 = vmatprep.mubr.f32.mxu0 0.0
      %v1979 = vand.u32 %v1618, 4294901760
      %1980 = vmatmul.mubr.f32.gmra.mrb[0].mxu0 %v1979
      %v1981 = vpop.f32.mrb[0].mxu0
      %v1982 = vadd.f32 %v1741, %v1981
      %v1983 = vpop.f32.mrb[0].mxu0
      %1984 = vmatprep.mubr.f32.mxu0 0.0
      %v1985 = vand.u32 %v1621, 4294901760
      %1986 = vmatmul.mubr.f32.gmra.mrb[0].mxu0 %v1985
      %v1987 = vpop.f32.mrb[0].mxu0
      %v1988 = vadd.f32 %v1751, %v1987
      %v1989 = vpop.f32.mrb[0].mxu0
      %1990 = vmatprep.mubr.f32.mxu0 0.0
      %v1991 = vand.u32 %v1624, 4294901760
      %1992 = vmatmul.mubr.f32.gmra.mrb[0].mxu0 %v1991
      %v1993 = vpop.f32.mrb[0].mxu0
      %v1994 = vadd.f32 %v1761, %v1993
      %v1995 = vpop.f32.mrb[0].mxu0
      %1996 = vmatprep.mubr.f32.mxu0 0.0
      %v1997 = vand.u32 %v1627, 4294901760
      %1998 = vmatmul.mubr.f32.gmra.mrb[0].mxu0 %v1997
      %v1999 = vpop.f32.mrb[0].mxu0
      %v2000 = vadd.f32 %v1771, %v1999
      %v2001 = vpop.f32.mrb[0].mxu0
      %2002 = vmatprep.mubr.f32.mxu0 0.0
      %v2003 = vand.u32 %v1630, 4294901760
      %2004 = vmatmul.mubr.f32.gmra.mrb[0].mxu0 %v2003
      %v2005 = vpop.f32.mrb[0].mxu0
      %v2006 = vadd.f32 %v1781, %v2005
      %v2007 = vpop.f32.mrb[0].mxu0
      %2008 = vmatprep.mubr.f32.mxu0 0.0
      %v2009 = vand.u32 %v1633, 4294901760
      %2010 = vmatmul.mubr.f32.gmra.mrb[0].mxu0 %v2009
      %v2011 = vpop.f32.mrb[0].mxu0
      %v2012 = vadd.f32 %v1791, %v2011
      %v2013 = vpop.f32.mrb[0].mxu0
      %2014 = vmatprep.mubr.f32.mxu0 0.0
      %v2015 = vand.u32 %v1636, 4294901760
      %2016 = vmatmul.mubr.f32.gmra.mrb[0].mxu0 %v2015
      %v2017 = vpop.f32.mrb[0].mxu0
      %v2018 = vadd.f32 %v1801, %v2017
      %v2019 = vpop.f32.mrb[0].mxu0
      %2020 = vmatprep.mubr.f32.mxu0 0.0
      %v2021 = vand.u32 %v1639, 4294901760
      %2022 = vmatmul.mubr.f32.gmra.mrb[0].mxu0 %v2021
      %v2023 = vpop.f32.mrb[0].mxu0
      %v2024 = vadd.f32 %v1811, %v2023
      %v2025 = vpop.f32.mrb[0].mxu0
      %2026 = vmatprep.mubr.f32.mxu0 0.0
      %v2027 = vand.u32 %v1642, 4294901760
      %2028 = vmatmul.mubr.f32.gmra.mrb[0].mxu0 %v2027
      %v2029 = vpop.f32.mrb[0].mxu0
      %v2030 = vadd.f32 %v1821, %v2029
      %v2031 = vpop.f32.mrb[0].mxu0
      %2032 = vmatprep.mubr.f32.mxu0 0.0
      %v2033 = vand.u32 %v1645, 4294901760
      %2034 = vmatmul.mubr.f32.gmra.mrb[0].mxu0 %v2033
      %v2035 = vpop.f32.mrb[0].mxu0
      %v2036 = vadd.f32 %v1831, %v2035
      %v2037 = vpop.f32.mrb[0].mxu0
      %2038 = vmatprep.mubr.f32.mxu0 0.0
      %v2039 = vand.u32 %v1648, 4294901760
      %2040 = vmatmul.mubr.f32.gmra.mrb[0].mxu0 %v2039
      %v2041 = vpop.f32.mrb[0].mxu0
      %v2042 = vadd.f32 %v1841, %v2041
      %v2043 = vpop.f32.mrb[0].mxu0
      %2044 = vmatprep.mubr.f32.mxu0 0.0
      %v2045 = vand.u32 %v1651, 4294901760
      %2046 = vmatmul.mubr.f32.gmra.mrb[0].mxu0 %v2045
      %v2047 = vpop.f32.mrb[0].mxu0
      %v2048 = vadd.f32 %v1851, %v2047
      %v2049 = vpop.f32.mrb[0].mxu0
      %2050 = vmatprep.mubr.f32.mxu0 0.0
      %v2051 = vand.u32 %v1654, 4294901760
      %2052 = vmatmul.mubr.f32.gmra.mrb[0].mxu0 %v2051
      %v2053 = vpop.f32.mrb[0].mxu0
      %v2054 = vadd.f32 %v1861, %v2053
      %v2055 = vpop.f32.mrb[0].mxu0
      %2056 = vmatprep.mubr.f32.mxu0 0.0
      %v2057 = vand.u32 %v1657, 4294901760
      %2058 = vmatmul.mubr.f32.gmra.mrb[0].mxu0 %v2057
      %v2059 = vpop.f32.mrb[0].mxu0
      %v2060 = vadd.f32 %v1871, %v2059
      %v2061 = vpop.f32.mrb[0].mxu0
      %2062 = vmatprep.mubr.f32.mxu0 0.0
      %v2063 = vand.u32 %v1660, 4294901760
      %2064 = vmatmul.mubr.f32.gmra.mrb[0].mxu0 %v2063
      %v2065 = vpop.f32.mrb[0].mxu0
      %v2066 = vadd.f32 %v1881, %v2065
      %v2067 = vpop.f32.mrb[0].mxu0
      %2068 = vmatprep.mubr.f32.mxu0 0.0
      %v2069 = vand.u32 %v1663, 4294901760
      %2070 = vmatmul.mubr.f32.gmra.mrb[0].mxu0 %v2069
      %v2071 = vpop.f32.mrb[0].mxu0
      %v2072 = vadd.f32 %v1891, %v2071
      %v2073 = vpop.f32.mrb[0].mxu0
      %2074 = vdwg.mxu0
      %2075 = vmatprep.subr.mxu0 0.0
      %v2076 = vand.u32 %v1608, 4294901760
      %v2077 = vsub.f32 %v1608, %v2076
      %2078 = vmatpush1.msra.mxu0 %v2077
      %2079 = vmatprep.subr.mxu0 0.0
      %v2080 = vand.u32 %v1609, 4294901760
      %v2081 = vsub.f32 %v1609, %v2080
      %2082 = vmatpush1.msra.mxu0 %v2081
      %2083 = vmatprep.subr.mxu0 0.0
      %v2084 = vand.u32 %v1610, 4294901760
      %v2085 = vsub.f32 %v1610, %v2084
      %2086 = vmatpush1.msra.mxu0 %v2085
      %2087 = vmatprep.subr.mxu0 0.0
      %v2088 = vand.u32 %v1611, 4294901760
      %v2089 = vsub.f32 %v1611, %v2088
      %2090 = vmatpush1.msra.mxu0 %v2089
      %2091 = vmatprep.subr.mxu0 0.0
      %2092 = vmatpush1.msra.mxu0 0.0
      %2093 = vmatprep.subr.mxu0 0.0
      %2094 = vmatpush1.msra.mxu0 0.0
      %2095 = vmatprep.subr.mxu0 0.0
      %2096 = vmatpush1.msra.mxu0 0.0
      %2097 = vmatprep.subr.mxu0 0.0
      %2098 = vmatpush1.msra.mxu0 0.0
      %2099 = vmatprep.subr.mxu0 0.0
      %2100 = vmatpush1.msra.mxu0 0.0
      %2101 = vmatprep.subr.mxu0 0.0
      %2102 = vmatpush1.msra.mxu0 0.0
      %2103 = vmatprep.subr.mxu0 0.0
      %2104 = vmatpush1.msra.mxu0 0.0
      %2105 = vmatprep.subr.mxu0 0.0
      %2106 = vmatpush1.msra.mxu0 0.0
      %2107 = vmatprep.subr.mxu0 0.0
      %2108 = vmatpush1.msra.mxu0 0.0
      %2109 = vmatprep.subr.mxu0 0.0
      %2110 = vmatpush1.msra.mxu0 0.0
      %2111 = vmatprep.subr.mxu0 0.0
      %2112 = vmatpush1.msra.mxu0 0.0
      %2113 = vmatprep.subr.mxu0 0.0
      %2114 = vmatpush1.msra.mxu0 0.0
      %2115 = vmatprep.subr.mxu0 0.0
      %2116 = vmatpush1.msra.mxu0 0.0
      %2117 = vmatprep.subr.mxu0 0.0
      %2118 = vmatpush1.msra.mxu0 0.0
      %2119 = vmatprep.subr.mxu0 0.0
      %2120 = vmatpush1.msra.mxu0 0.0
      %2121 = vmatprep.subr.mxu0 0.0
      %2122 = vmatpush1.msra.mxu0 0.0
      %2123 = vmatprep.subr.mxu0 0.0
      %2124 = vmatpush1.msra.mxu0 0.0
      %2125 = vmatprep.subr.mxu0 0.0
      %2126 = vmatpush1.msra.mxu0 0.0
      %2127 = vmatprep.subr.mxu0 0.0
      %2128 = vmatpush1.msra.mxu0 0.0
      %2129 = vmatprep.subr.mxu0 0.0
      %2130 = vmatpush1.msra.mxu0 0.0
      %2131 = vmatprep.subr.mxu0 0.0
      %2132 = vmatpush1.msra.mxu0 0.0
      %2133 = vmatprep.subr.mxu0 0.0
      %2134 = vmatpush1.msra.mxu0 0.0
      %2135 = vmatprep.subr.mxu0 0.0
      %2136 = vmatpush1.msra.mxu0 0.0
      %2137 = vmatprep.subr.mxu0 0.0
      %2138 = vmatpush1.msra.mxu0 0.0
      %2139 = vmatprep.subr.mxu0 0.0
      %2140 = vmatpush1.msra.mxu0 0.0
      %2141 = vmatprep.subr.mxu0 0.0
      %2142 = vmatpush1.msra.mxu0 0.0
      %2143 = vmatprep.subr.mxu0 0.0
      %2144 = vmatpush1.msra.mxu0 0.0
      %2145 = vmatprep.subr.mxu0 0.0
      %2146 = vmatpush1.msra.mxu0 0.0
      %2147 = vmatprep.mubr.f32.mxu0 0.0
      %v2148 = vand.u32 %v1618, 4294901760
      %v2149 = vsub.f32 %v1618, %v2148
      %2150 = vmatmul.mubr.f32.gmra.mrb[0].mxu0 %v2149
      %v2151 = vpop.f32.mrb[0].mxu0
      %v2152 = vadd.f32 %v1982, %v2151
      %v2153 = vpop.f32.mrb[0].mxu0
      %2154 = vmatprep.mubr.f32.mxu0 0.0
      %v2155 = vand.u32 %v1621, 4294901760
      %v2156 = vsub.f32 %v1621, %v2155
      %2157 = vmatmul.mubr.f32.gmra.mrb[0].mxu0 %v2156
      %v2158 = vpop.f32.mrb[0].mxu0
      %v2159 = vadd.f32 %v1988, %v2158
      %v2160 = vpop.f32.mrb[0].mxu0
      %2161 = vmatprep.mubr.f32.mxu0 0.0
      %v2162 = vand.u32 %v1624, 4294901760
      %v2163 = vsub.f32 %v1624, %v2162
      %2164 = vmatmul.mubr.f32.gmra.mrb[0].mxu0 %v2163
      %v2165 = vpop.f32.mrb[0].mxu0
      %v2166 = vadd.f32 %v1994, %v2165
      %v2167 = vpop.f32.mrb[0].mxu0
      %2168 = vmatprep.mubr.f32.mxu0 0.0
      %v2169 = vand.u32 %v1627, 4294901760
      %v2170 = vsub.f32 %v1627, %v2169
      %2171 = vmatmul.mubr.f32.gmra.mrb[0].mxu0 %v2170
      %v2172 = vpop.f32.mrb[0].mxu0
      %v2173 = vadd.f32 %v2000, %v2172
      %v2174 = vpop.f32.mrb[0].mxu0
      %2175 = vmatprep.mubr.f32.mxu0 0.0
      %v2176 = vand.u32 %v1630, 4294901760
      %v2177 = vsub.f32 %v1630, %v2176
      %2178 = vmatmul.mubr.f32.gmra.mrb[0].mxu0 %v2177
      %v2179 = vpop.f32.mrb[0].mxu0
      %v2180 = vadd.f32 %v2006, %v2179
      %v2181 = vpop.f32.mrb[0].mxu0
      %2182 = vmatprep.mubr.f32.mxu0 0.0
      %v2183 = vand.u32 %v1633, 4294901760
      %v2184 = vsub.f32 %v1633, %v2183
      %2185 = vmatmul.mubr.f32.gmra.mrb[0].mxu0 %v2184
      %v2186 = vpop.f32.mrb[0].mxu0
      %v2187 = vadd.f32 %v2012, %v2186
      %v2188 = vpop.f32.mrb[0].mxu0
      %2189 = vmatprep.mubr.f32.mxu0 0.0
      %v2190 = vand.u32 %v1636, 4294901760
      %v2191 = vsub.f32 %v1636, %v2190
      %2192 = vmatmul.mubr.f32.gmra.mrb[0].mxu0 %v2191
      %v2193 = vpop.f32.mrb[0].mxu0
      %v2194 = vadd.f32 %v2018, %v2193
      %v2195 = vpop.f32.mrb[0].mxu0
      %2196 = vmatprep.mubr.f32.mxu0 0.0
      %v2197 = vand.u32 %v1639, 4294901760
      %v2198 = vsub.f32 %v1639, %v2197
      %2199 = vmatmul.mubr.f32.gmra.mrb[0].mxu0 %v2198
      %v2200 = vpop.f32.mrb[0].mxu0
      %v2201 = vadd.f32 %v2024, %v2200
      %v2202 = vpop.f32.mrb[0].mxu0
      %2203 = vmatprep.mubr.f32.mxu0 0.0
      %v2204 = vand.u32 %v1642, 4294901760
      %v2205 = vsub.f32 %v1642, %v2204
      %2206 = vmatmul.mubr.f32.gmra.mrb[0].mxu0 %v2205
      %v2207 = vpop.f32.mrb[0].mxu0
      %v2208 = vadd.f32 %v2030, %v2207
      %v2209 = vpop.f32.mrb[0].mxu0
      %2210 = vmatprep.mubr.f32.mxu0 0.0
      %v2211 = vand.u32 %v1645, 4294901760
      %v2212 = vsub.f32 %v1645, %v2211
      %2213 = vmatmul.mubr.f32.gmra.mrb[0].mxu0 %v2212
      %v2214 = vpop.f32.mrb[0].mxu0
      %v2215 = vadd.f32 %v2036, %v2214
      %v2216 = vpop.f32.mrb[0].mxu0
      %2217 = vmatprep.mubr.f32.mxu0 0.0
      %v2218 = vand.u32 %v1648, 4294901760
      %v2219 = vsub.f32 %v1648, %v2218
      %2220 = vmatmul.mubr.f32.gmra.mrb[0].mxu0 %v2219
      %v2221 = vpop.f32.mrb[0].mxu0
      %v2222 = vadd.f32 %v2042, %v2221
      %v2223 = vpop.f32.mrb[0].mxu0
      %2224 = vmatprep.mubr.f32.mxu0 0.0
      %v2225 = vand.u32 %v1651, 4294901760
      %v2226 = vsub.f32 %v1651, %v2225
      %2227 = vmatmul.mubr.f32.gmra.mrb[0].mxu0 %v2226
      %v2228 = vpop.f32.mrb[0].mxu0
      %v2229 = vadd.f32 %v2048, %v2228
      %v2230 = vpop.f32.mrb[0].mxu0
      %2231 = vmatprep.mubr.f32.mxu0 0.0
      %v2232 = vand.u32 %v1654, 4294901760
      %v2233 = vsub.f32 %v1654, %v2232
      %2234 = vmatmul.mubr.f32.gmra.mrb[0].mxu0 %v2233
      %v2235 = vpop.f32.mrb[0].mxu0
      %v2236 = vadd.f32 %v2054, %v2235
      %v2237 = vpop.f32.mrb[0].mxu0
      %2238 = vmatprep.mubr.f32.mxu0 0.0
      %v2239 = vand.u32 %v1657, 4294901760
      %v2240 = vsub.f32 %v1657, %v2239
      %2241 = vmatmul.mubr.f32.gmra.mrb[0].mxu0 %v2240
      %v2242 = vpop.f32.mrb[0].mxu0
      %v2243 = vadd.f32 %v2060, %v2242
      %v2244 = vpop.f32.mrb[0].mxu0
      %2245 = vmatprep.mubr.f32.mxu0 0.0
      %v2246 = vand.u32 %v1660, 4294901760
      %v2247 = vsub.f32 %v1660, %v2246
      %2248 = vmatmul.mubr.f32.gmra.mrb[0].mxu0 %v2247
      %v2249 = vpop.f32.mrb[0].mxu0
      %v2250 = vadd.f32 %v2066, %v2249
      %v2251 = vpop.f32.mrb[0].mxu0
      %2252 = vmatprep.mubr.f32.mxu0 0.0
      %v2253 = vand.u32 %v1663, 4294901760
      %v2254 = vsub.f32 %v1663, %v2253
      %2255 = vmatmul.mubr.f32.gmra.mrb[0].mxu0 %v2254
      %v2256 = vpop.f32.mrb[0].mxu0
      %v2257 = vadd.f32 %v2072, %v2256
      %v2258 = vpop.f32.mrb[0].mxu0
      %2259 = vdwg.mxu0
      %2260 = vmatprep.subr.mxu0 0.0
      %v2261 = vand.u32 %v1608, 4294901760
      %2262 = vmatpush1.msra.mxu0 %v2261
      %2263 = vmatprep.subr.mxu0 0.0
      %v2264 = vand.u32 %v1609, 4294901760
      %2265 = vmatpush1.msra.mxu0 %v2264
      %2266 = vmatprep.subr.mxu0 0.0
      %v2267 = vand.u32 %v1610, 4294901760
      %2268 = vmatpush1.msra.mxu0 %v2267
      %2269 = vmatprep.subr.mxu0 0.0
      %v2270 = vand.u32 %v1611, 4294901760
      %2271 = vmatpush1.msra.mxu0 %v2270
      %2272 = vmatprep.subr.mxu0 0.0
      %2273 = vmatpush1.msra.mxu0 0.0
      %2274 = vmatprep.subr.mxu0 0.0
      %2275 = vmatpush1.msra.mxu0 0.0
      %2276 = vmatprep.subr.mxu0 0.0
      %2277 = vmatpush1.msra.mxu0 0.0
      %2278 = vmatprep.subr.mxu0 0.0
      %2279 = vmatpush1.msra.mxu0 0.0
      %2280 = vmatprep.subr.mxu0 0.0
      %2281 = vmatpush1.msra.mxu0 0.0
      %2282 = vmatprep.subr.mxu0 0.0
      %2283 = vmatpush1.msra.mxu0 0.0
      %2284 = vmatprep.subr.mxu0 0.0
      %2285 = vmatpush1.msra.mxu0 0.0
      %2286 = vmatprep.subr.mxu0 0.0
      %2287 = vmatpush1.msra.mxu0 0.0
      %2288 = vmatprep.subr.mxu0 0.0
      %2289 = vmatpush1.msra.mxu0 0.0
      %2290 = vmatprep.subr.mxu0 0.0
      %2291 = vmatpush1.msra.mxu0 0.0
      %2292 = vmatprep.subr.mxu0 0.0
      %2293 = vmatpush1.msra.mxu0 0.0
      %2294 = vmatprep.subr.mxu0 0.0
      %2295 = vmatpush1.msra.mxu0 0.0
      %2296 = vmatprep.subr.mxu0 0.0
      %2297 = vmatpush1.msra.mxu0 0.0
      %2298 = vmatprep.subr.mxu0 0.0
      %2299 = vmatpush1.msra.mxu0 0.0
      %2300 = vmatprep.subr.mxu0 0.0
      %2301 = vmatpush1.msra.mxu0 0.0
      %2302 = vmatprep.subr.mxu0 0.0
      %2303 = vmatpush1.msra.mxu0 0.0
      %2304 = vmatprep.subr.mxu0 0.0
      %2305 = vmatpush1.msra.mxu0 0.0
      %2306 = vmatprep.subr.mxu0 0.0
      %2307 = vmatpush1.msra.mxu0 0.0
      %2308 = vmatprep.subr.mxu0 0.0
      %2309 = vmatpush1.msra.mxu0 0.0
      %2310 = vmatprep.subr.mxu0 0.0
      %2311 = vmatpush1.msra.mxu0 0.0
      %2312 = vmatprep.subr.mxu0 0.0
      %2313 = vmatpush1.msra.mxu0 0.0
      %2314 = vmatprep.subr.mxu0 0.0
      %2315 = vmatpush1.msra.mxu0 0.0
      %2316 = vmatprep.subr.mxu0 0.0
      %2317 = vmatpush1.msra.mxu0 0.0
      %2318 = vmatprep.subr.mxu0 0.0
      %2319 = vmatpush1.msra.mxu0 0.0
      %2320 = vmatprep.subr.mxu0 0.0
      %2321 = vmatpush1.msra.mxu0 0.0
      %2322 = vmatprep.subr.mxu0 0.0
      %2323 = vmatpush1.msra.mxu0 0.0
      %2324 = vmatprep.subr.mxu0 0.0
      %2325 = vmatpush1.msra.mxu0 0.0
      %2326 = vmatprep.subr.mxu0 0.0
      %2327 = vmatpush1.msra.mxu0 0.0
      %2328 = vmatprep.mubr.f32.mxu0 0.0
      %v2329 = vand.u32 %v1618, 4294901760
      %v2330 = vsub.f32 %v1618, %v2329
      %v2331 = vand.u32 %v2330, 4294901760
      %2332 = vmatmul.mubr.f32.gmra.mrb[0].mxu0 %v2331
      %v2333 = vpop.f32.mrb[0].mxu0
      %v2334 = vadd.f32 %v2152, %v2333
      %v2335 = vpop.f32.mrb[0].mxu0
      %2336 = vmatprep.mubr.f32.mxu0 0.0
      %v2337 = vand.u32 %v1621, 4294901760
      %v2338 = vsub.f32 %v1621, %v2337
      %v2339 = vand.u32 %v2338, 4294901760
      %2340 = vmatmul.mubr.f32.gmra.mrb[0].mxu0 %v2339
      %v2341 = vpop.f32.mrb[0].mxu0
      %v2342 = vadd.f32 %v2159, %v2341
      %v2343 = vpop.f32.mrb[0].mxu0
      %2344 = vmatprep.mubr.f32.mxu0 0.0
      %v2345 = vand.u32 %v1624, 4294901760
      %v2346 = vsub.f32 %v1624, %v2345
      %v2347 = vand.u32 %v2346, 4294901760
      %2348 = vmatmul.mubr.f32.gmra.mrb[0].mxu0 %v2347
      %v2349 = vpop.f32.mrb[0].mxu0
      %v2350 = vadd.f32 %v2166, %v2349
      %v2351 = vpop.f32.mrb[0].mxu0
      %2352 = vmatprep.mubr.f32.mxu0 0.0
      %v2353 = vand.u32 %v1627, 4294901760
      %v2354 = vsub.f32 %v1627, %v2353
      %v2355 = vand.u32 %v2354, 4294901760
      %2356 = vmatmul.mubr.f32.gmra.mrb[0].mxu0 %v2355
      %v2357 = vpop.f32.mrb[0].mxu0
      %v2358 = vadd.f32 %v2173, %v2357
      %v2359 = vpop.f32.mrb[0].mxu0
      %2360 = vmatprep.mubr.f32.mxu0 0.0
      %v2361 = vand.u32 %v1630, 4294901760
      %v2362 = vsub.f32 %v1630, %v2361
      %v2363 = vand.u32 %v2362, 4294901760
      %2364 = vmatmul.mubr.f32.gmra.mrb[0].mxu0 %v2363
      %v2365 = vpop.f32.mrb[0].mxu0
      %v2366 = vadd.f32 %v2180, %v2365
      %v2367 = vpop.f32.mrb[0].mxu0
      %2368 = vmatprep.mubr.f32.mxu0 0.0
      %v2369 = vand.u32 %v1633, 4294901760
      %v2370 = vsub.f32 %v1633, %v2369
      %v2371 = vand.u32 %v2370, 4294901760
      %2372 = vmatmul.mubr.f32.gmra.mrb[0].mxu0 %v2371
      %v2373 = vpop.f32.mrb[0].mxu0
      %v2374 = vadd.f32 %v2187, %v2373
      %v2375 = vpop.f32.mrb[0].mxu0
      %2376 = vmatprep.mubr.f32.mxu0 0.0
      %v2377 = vand.u32 %v1636, 4294901760
      %v2378 = vsub.f32 %v1636, %v2377
      %v2379 = vand.u32 %v2378, 4294901760
      %2380 = vmatmul.mubr.f32.gmra.mrb[0].mxu0 %v2379
      %v2381 = vpop.f32.mrb[0].mxu0
      %v2382 = vadd.f32 %v2194, %v2381
      %v2383 = vpop.f32.mrb[0].mxu0
      %2384 = vmatprep.mubr.f32.mxu0 0.0
      %v2385 = vand.u32 %v1639, 4294901760
      %v2386 = vsub.f32 %v1639, %v2385
      %v2387 = vand.u32 %v2386, 4294901760
      %2388 = vmatmul.mubr.f32.gmra.mrb[0].mxu0 %v2387
      %v2389 = vpop.f32.mrb[0].mxu0
      %v2390 = vadd.f32 %v2201, %v2389
      %v2391 = vpop.f32.mrb[0].mxu0
      %2392 = vmatprep.mubr.f32.mxu0 0.0
      %v2393 = vand.u32 %v1642, 4294901760
      %v2394 = vsub.f32 %v1642, %v2393
      %v2395 = vand.u32 %v2394, 4294901760
      %2396 = vmatmul.mubr.f32.gmra.mrb[0].mxu0 %v2395
      %v2397 = vpop.f32.mrb[0].mxu0
      %v2398 = vadd.f32 %v2208, %v2397
      %v2399 = vpop.f32.mrb[0].mxu0
      %2400 = vmatprep.mubr.f32.mxu0 0.0
      %v2401 = vand.u32 %v1645, 4294901760
      %v2402 = vsub.f32 %v1645, %v2401
      %v2403 = vand.u32 %v2402, 4294901760
      %2404 = vmatmul.mubr.f32.gmra.mrb[0].mxu0 %v2403
      %v2405 = vpop.f32.mrb[0].mxu0
      %v2406 = vadd.f32 %v2215, %v2405
      %v2407 = vpop.f32.mrb[0].mxu0
      %2408 = vmatprep.mubr.f32.mxu0 0.0
      %v2409 = vand.u32 %v1648, 4294901760
      %v2410 = vsub.f32 %v1648, %v2409
      %v2411 = vand.u32 %v2410, 4294901760
      %2412 = vmatmul.mubr.f32.gmra.mrb[0].mxu0 %v2411
      %v2413 = vpop.f32.mrb[0].mxu0
      %v2414 = vadd.f32 %v2222, %v2413
      %v2415 = vpop.f32.mrb[0].mxu0
      %2416 = vmatprep.mubr.f32.mxu0 0.0
      %v2417 = vand.u32 %v1651, 4294901760
      %v2418 = vsub.f32 %v1651, %v2417
      %v2419 = vand.u32 %v2418, 4294901760
      %2420 = vmatmul.mubr.f32.gmra.mrb[0].mxu0 %v2419
      %v2421 = vpop.f32.mrb[0].mxu0
      %v2422 = vadd.f32 %v2229, %v2421
      %v2423 = vpop.f32.mrb[0].mxu0
      %2424 = vmatprep.mubr.f32.mxu0 0.0
      %v2425 = vand.u32 %v1654, 4294901760
      %v2426 = vsub.f32 %v1654, %v2425
      %v2427 = vand.u32 %v2426, 4294901760
      %2428 = vmatmul.mubr.f32.gmra.mrb[0].mxu0 %v2427
      %v2429 = vpop.f32.mrb[0].mxu0
      %v2430 = vadd.f32 %v2236, %v2429
      %v2431 = vpop.f32.mrb[0].mxu0
      %2432 = vmatprep.mubr.f32.mxu0 0.0
      %v2433 = vand.u32 %v1657, 4294901760
      %v2434 = vsub.f32 %v1657, %v2433
      %v2435 = vand.u32 %v2434, 4294901760
      %2436 = vmatmul.mubr.f32.gmra.mrb[0].mxu0 %v2435
      %v2437 = vpop.f32.mrb[0].mxu0
      %v2438 = vadd.f32 %v2243, %v2437
      %v2439 = vpop.f32.mrb[0].mxu0
      %2440 = vmatprep.mubr.f32.mxu0 0.0
      %v2441 = vand.u32 %v1660, 4294901760
      %v2442 = vsub.f32 %v1660, %v2441
      %v2443 = vand.u32 %v2442, 4294901760
      %2444 = vmatmul.mubr.f32.gmra.mrb[0].mxu0 %v2443
      %v2445 = vpop.f32.mrb[0].mxu0
      %v2446 = vadd.f32 %v2250, %v2445
      %v2447 = vpop.f32.mrb[0].mxu0
      %2448 = vmatprep.mubr.f32.mxu0 0.0
      %v2449 = vand.u32 %v1663, 4294901760
      %v2450 = vsub.f32 %v1663, %v2449
      %v2451 = vand.u32 %v2450, 4294901760
      %2452 = vmatmul.mubr.f32.gmra.mrb[0].mxu0 %v2451
      %v2453 = vpop.f32.mrb[0].mxu0
      %v2454 = vadd.f32 %v2257, %v2453
      %v2455 = vpop.f32.mrb[0].mxu0
      %2456 = vdwg.mxu0
      %2457 = vmatprep.subr.mxu0 0.0
      %v2458 = vand.u32 %v1608, 4294901760
      %v2459 = vsub.f32 %v1608, %v2458
      %v2460 = vand.u32 %v2459, 4294901760
      %2461 = vmatpush1.msra.mxu0 %v2460
      %2462 = vmatprep.subr.mxu0 0.0
      %v2463 = vand.u32 %v1609, 4294901760
      %v2464 = vsub.f32 %v1609, %v2463
      %v2465 = vand.u32 %v2464, 4294901760
      %2466 = vmatpush1.msra.mxu0 %v2465
      %2467 = vmatprep.subr.mxu0 0.0
      %v2468 = vand.u32 %v1610, 4294901760
      %v2469 = vsub.f32 %v1610, %v2468
      %v2470 = vand.u32 %v2469, 4294901760
      %2471 = vmatpush1.msra.mxu0 %v2470
      %2472 = vmatprep.subr.mxu0 0.0
      %v2473 = vand.u32 %v1611, 4294901760
      %v2474 = vsub.f32 %v1611, %v2473
      %v2475 = vand.u32 %v2474, 4294901760
      %2476 = vmatpush1.msra.mxu0 %v2475
      %2477 = vmatprep.subr.mxu0 0.0
      %2478 = vmatpush1.msra.mxu0 0.0
      %2479 = vmatprep.subr.mxu0 0.0
      %2480 = vmatpush1.msra.mxu0 0.0
      %2481 = vmatprep.subr.mxu0 0.0
      %2482 = vmatpush1.msra.mxu0 0.0
      %2483 = vmatprep.subr.mxu0 0.0
      %2484 = vmatpush1.msra.mxu0 0.0
      %2485 = vmatprep.subr.mxu0 0.0
      %2486 = vmatpush1.msra.mxu0 0.0
      %2487 = vmatprep.subr.mxu0 0.0
      %2488 = vmatpush1.msra.mxu0 0.0
      %2489 = vmatprep.subr.mxu0 0.0
      %2490 = vmatpush1.msra.mxu0 0.0
      %2491 = vmatprep.subr.mxu0 0.0
      %2492 = vmatpush1.msra.mxu0 0.0
      %2493 = vmatprep.subr.mxu0 0.0
      %2494 = vmatpush1.msra.mxu0 0.0
      %2495 = vmatprep.subr.mxu0 0.0
      %2496 = vmatpush1.msra.mxu0 0.0
      %2497 = vmatprep.subr.mxu0 0.0
      %2498 = vmatpush1.msra.mxu0 0.0
      %2499 = vmatprep.subr.mxu0 0.0
      %2500 = vmatpush1.msra.mxu0 0.0
      %2501 = vmatprep.subr.mxu0 0.0
      %2502 = vmatpush1.msra.mxu0 0.0
      %2503 = vmatprep.subr.mxu0 0.0
      %2504 = vmatpush1.msra.mxu0 0.0
      %2505 = vmatprep.subr.mxu0 0.0
      %2506 = vmatpush1.msra.mxu0 0.0
      %2507 = vmatprep.subr.mxu0 0.0
      %2508 = vmatpush1.msra.mxu0 0.0
      %2509 = vmatprep.subr.mxu0 0.0
      %2510 = vmatpush1.msra.mxu0 0.0
      %2511 = vmatprep.subr.mxu0 0.0
      %2512 = vmatpush1.msra.mxu0 0.0
      %2513 = vmatprep.subr.mxu0 0.0
      %2514 = vmatpush1.msra.mxu0 0.0
      %2515 = vmatprep.subr.mxu0 0.0
      %2516 = vmatpush1.msra.mxu0 0.0
      %2517 = vmatprep.subr.mxu0 0.0
      %2518 = vmatpush1.msra.mxu0 0.0
      %2519 = vmatprep.subr.mxu0 0.0
      %2520 = vmatpush1.msra.mxu0 0.0
      %2521 = vmatprep.subr.mxu0 0.0
      %2522 = vmatpush1.msra.mxu0 0.0
      %2523 = vmatprep.subr.mxu0 0.0
      %2524 = vmatpush1.msra.mxu0 0.0
      %2525 = vmatprep.subr.mxu0 0.0
      %2526 = vmatpush1.msra.mxu0 0.0
      %2527 = vmatprep.subr.mxu0 0.0
      %2528 = vmatpush1.msra.mxu0 0.0
      %2529 = vmatprep.subr.mxu0 0.0
      %2530 = vmatpush1.msra.mxu0 0.0
      %2531 = vmatprep.subr.mxu0 0.0
      %2532 = vmatpush1.msra.mxu0 0.0
      %2533 = vmatprep.mubr.f32.mxu0 0.0
      %v2534 = vand.u32 %v1618, 4294901760
      %2535 = vmatmul.mubr.f32.gmra.mrb[0].mxu0 %v2534
      %v2536 = vpop.f32.mrb[0].mxu0
      %v2537 = vadd.f32 %v2334, %v2536
      %v2538 = vpop.f32.mrb[0].mxu0
      %2539 = vmatprep.mubr.f32.mxu0 0.0
      %v2540 = vand.u32 %v1621, 4294901760
      %2541 = vmatmul.mubr.f32.gmra.mrb[0].mxu0 %v2540
      %v2542 = vpop.f32.mrb[0].mxu0
      %v2543 = vadd.f32 %v2342, %v2542
      %v2544 = vpop.f32.mrb[0].mxu0
      %2545 = vmatprep.mubr.f32.mxu0 0.0
      %v2546 = vand.u32 %v1624, 4294901760
      %2547 = vmatmul.mubr.f32.gmra.mrb[0].mxu0 %v2546
      %v2548 = vpop.f32.mrb[0].mxu0
      %v2549 = vadd.f32 %v2350, %v2548
      %v2550 = vpop.f32.mrb[0].mxu0
      %2551 = vmatprep.mubr.f32.mxu0 0.0
      %v2552 = vand.u32 %v1627, 4294901760
      %2553 = vmatmul.mubr.f32.gmra.mrb[0].mxu0 %v2552
      %v2554 = vpop.f32.mrb[0].mxu0
      %v2555 = vadd.f32 %v2358, %v2554
      %v2556 = vpop.f32.mrb[0].mxu0
      %2557 = vmatprep.mubr.f32.mxu0 0.0
      %v2558 = vand.u32 %v1630, 4294901760
      %2559 = vmatmul.mubr.f32.gmra.mrb[0].mxu0 %v2558
      %v2560 = vpop.f32.mrb[0].mxu0
      %v2561 = vadd.f32 %v2366, %v2560
      %v2562 = vpop.f32.mrb[0].mxu0
      %2563 = vmatprep.mubr.f32.mxu0 0.0
      %v2564 = vand.u32 %v1633, 4294901760
      %2565 = vmatmul.mubr.f32.gmra.mrb[0].mxu0 %v2564
      %v2566 = vpop.f32.mrb[0].mxu0
      %v2567 = vadd.f32 %v2374, %v2566
      %v2568 = vpop.f32.mrb[0].mxu0
      %2569 = vmatprep.mubr.f32.mxu0 0.0
      %v2570 = vand.u32 %v1636, 4294901760
      %2571 = vmatmul.mubr.f32.gmra.mrb[0].mxu0 %v2570
      %v2572 = vpop.f32.mrb[0].mxu0
      %v2573 = vadd.f32 %v2382, %v2572
      %v2574 = vpop.f32.mrb[0].mxu0
      %2575 = vmatprep.mubr.f32.mxu0 0.0
      %v2576 = vand.u32 %v1639, 4294901760
      %2577 = vmatmul.mubr.f32.gmra.mrb[0].mxu0 %v2576
      %v2578 = vpop.f32.mrb[0].mxu0
      %v2579 = vadd.f32 %v2390, %v2578
      %v2580 = vpop.f32.mrb[0].mxu0
      %2581 = vmatprep.mubr.f32.mxu0 0.0
      %v2582 = vand.u32 %v1642, 4294901760
      %2583 = vmatmul.mubr.f32.gmra.mrb[0].mxu0 %v2582
      %v2584 = vpop.f32.mrb[0].mxu0
      %v2585 = vadd.f32 %v2398, %v2584
      %v2586 = vpop.f32.mrb[0].mxu0
      %2587 = vmatprep.mubr.f32.mxu0 0.0
      %v2588 = vand.u32 %v1645, 4294901760
      %2589 = vmatmul.mubr.f32.gmra.mrb[0].mxu0 %v2588
      %v2590 = vpop.f32.mrb[0].mxu0
      %v2591 = vadd.f32 %v2406, %v2590
      %v2592 = vpop.f32.mrb[0].mxu0
      %2593 = vmatprep.mubr.f32.mxu0 0.0
      %v2594 = vand.u32 %v1648, 4294901760
      %2595 = vmatmul.mubr.f32.gmra.mrb[0].mxu0 %v2594
      %v2596 = vpop.f32.mrb[0].mxu0
      %v2597 = vadd.f32 %v2414, %v2596
      %v2598 = vpop.f32.mrb[0].mxu0
      %2599 = vmatprep.mubr.f32.mxu0 0.0
      %v2600 = vand.u32 %v1651, 4294901760
      %2601 = vmatmul.mubr.f32.gmra.mrb[0].mxu0 %v2600
      %v2602 = vpop.f32.mrb[0].mxu0
      %v2603 = vadd.f32 %v2422, %v2602
      %v2604 = vpop.f32.mrb[0].mxu0
      %2605 = vmatprep.mubr.f32.mxu0 0.0
      %v2606 = vand.u32 %v1654, 4294901760
      %2607 = vmatmul.mubr.f32.gmra.mrb[0].mxu0 %v2606
      %v2608 = vpop.f32.mrb[0].mxu0
      %v2609 = vadd.f32 %v2430, %v2608
      %v2610 = vpop.f32.mrb[0].mxu0
      %2611 = vmatprep.mubr.f32.mxu0 0.0
      %v2612 = vand.u32 %v1657, 4294901760
      %2613 = vmatmul.mubr.f32.gmra.mrb[0].mxu0 %v2612
      %v2614 = vpop.f32.mrb[0].mxu0
      %v2615 = vadd.f32 %v2438, %v2614
      %v2616 = vpop.f32.mrb[0].mxu0
      %2617 = vmatprep.mubr.f32.mxu0 0.0
      %v2618 = vand.u32 %v1660, 4294901760
      %2619 = vmatmul.mubr.f32.gmra.mrb[0].mxu0 %v2618
      %v2620 = vpop.f32.mrb[0].mxu0
      %v2621 = vadd.f32 %v2446, %v2620
      %v2622 = vpop.f32.mrb[0].mxu0
      %2623 = vmatprep.mubr.f32.mxu0 0.0
      %v2624 = vand.u32 %v1663, 4294901760
      %2625 = vmatmul.mubr.f32.gmra.mrb[0].mxu0 %v2624
      %v2626 = vpop.f32.mrb[0].mxu0
      %v2627 = vadd.f32 %v2454, %v2626
      %v2628 = vpop.f32.mrb[0].mxu0
      %2629 = vdwg.mxu0
      %2630 = vmatprep.subr.mxu0 0.0
      %v2631 = vand.u32 %v1608, 4294901760
      %2632 = vmatpush1.msra.mxu0 %v2631
      %2633 = vmatprep.subr.mxu0 0.0
      %v2634 = vand.u32 %v1609, 4294901760
      %2635 = vmatpush1.msra.mxu0 %v2634
      %2636 = vmatprep.subr.mxu0 0.0
      %v2637 = vand.u32 %v1610, 4294901760
      %2638 = vmatpush1.msra.mxu0 %v2637
      %2639 = vmatprep.subr.mxu0 0.0
      %v2640 = vand.u32 %v1611, 4294901760
      %2641 = vmatpush1.msra.mxu0 %v2640
      %2642 = vmatprep.subr.mxu0 0.0
      %2643 = vmatpush1.msra.mxu0 0.0
      %2644 = vmatprep.subr.mxu0 0.0
      %2645 = vmatpush1.msra.mxu0 0.0
      %2646 = vmatprep.subr.mxu0 0.0
      %2647 = vmatpush1.msra.mxu0 0.0
      %2648 = vmatprep.subr.mxu0 0.0
      %2649 = vmatpush1.msra.mxu0 0.0
      %2650 = vmatprep.subr.mxu0 0.0
      %2651 = vmatpush1.msra.mxu0 0.0
      %2652 = vmatprep.subr.mxu0 0.0
      %2653 = vmatpush1.msra.mxu0 0.0
      %2654 = vmatprep.subr.mxu0 0.0
      %2655 = vmatpush1.msra.mxu0 0.0
      %2656 = vmatprep.subr.mxu0 0.0
      %2657 = vmatpush1.msra.mxu0 0.0
      %2658 = vmatprep.subr.mxu0 0.0
      %2659 = vmatpush1.msra.mxu0 0.0
      %2660 = vmatprep.subr.mxu0 0.0
      %2661 = vmatpush1.msra.mxu0 0.0
      %2662 = vmatprep.subr.mxu0 0.0
      %2663 = vmatpush1.msra.mxu0 0.0
      %2664 = vmatprep.subr.mxu0 0.0
      %2665 = vmatpush1.msra.mxu0 0.0
      %2666 = vmatprep.subr.mxu0 0.0
      %2667 = vmatpush1.msra.mxu0 0.0
      %2668 = vmatprep.subr.mxu0 0.0
      %2669 = vmatpush1.msra.mxu0 0.0
      %2670 = vmatprep.subr.mxu0 0.0
      %2671 = vmatpush1.msra.mxu0 0.0
      %2672 = vmatprep.subr.mxu0 0.0
      %2673 = vmatpush1.msra.mxu0 0.0
      %2674 = vmatprep.subr.mxu0 0.0
      %2675 = vmatpush1.msra.mxu0 0.0
      %2676 = vmatprep.subr.mxu0 0.0
      %2677 = vmatpush1.msra.mxu0 0.0
      %2678 = vmatprep.subr.mxu0 0.0
      %2679 = vmatpush1.msra.mxu0 0.0
      %2680 = vmatprep.subr.mxu0 0.0
      %2681 = vmatpush1.msra.mxu0 0.0
      %2682 = vmatprep.subr.mxu0 0.0
      %2683 = vmatpush1.msra.mxu0 0.0
      %2684 = vmatprep.subr.mxu0 0.0
      %2685 = vmatpush1.msra.mxu0 0.0
      %2686 = vmatprep.subr.mxu0 0.0
      %2687 = vmatpush1.msra.mxu0 0.0
      %2688 = vmatprep.subr.mxu0 0.0
      %2689 = vmatpush1.msra.mxu0 0.0
      %2690 = vmatprep.subr.mxu0 0.0
      %2691 = vmatpush1.msra.mxu0 0.0
      %2692 = vmatprep.subr.mxu0 0.0
      %2693 = vmatpush1.msra.mxu0 0.0
      %2694 = vmatprep.subr.mxu0 0.0
      %2695 = vmatpush1.msra.mxu0 0.0
      %2696 = vmatprep.subr.mxu0 0.0
      %2697 = vmatpush1.msra.mxu0 0.0
      %2698 = vmatprep.mubr.f32.mxu0 0.0
      %v2699 = vand.u32 %v1618, 4294901760
      %2700 = vmatmul.mubr.f32.gmra.mrb[0].mxu0 %v2699
      %v2701 = vpop.f32.mrb[0].mxu0
      %v2702 = vadd.f32 %v2537, %v2701
      %v2703 = vpop.f32.mrb[0].mxu0
      %2704 = vmatprep.mubr.f32.mxu0 0.0
      %v2705 = vand.u32 %v1621, 4294901760
      %2706 = vmatmul.mubr.f32.gmra.mrb[0].mxu0 %v2705
      %v2707 = vpop.f32.mrb[0].mxu0
      %v2708 = vadd.f32 %v2543, %v2707
      %v2709 = vpop.f32.mrb[0].mxu0
      %2710 = vmatprep.mubr.f32.mxu0 0.0
      %v2711 = vand.u32 %v1624, 4294901760
      %2712 = vmatmul.mubr.f32.gmra.mrb[0].mxu0 %v2711
      %v2713 = vpop.f32.mrb[0].mxu0
      %v2714 = vadd.f32 %v2549, %v2713
      %v2715 = vpop.f32.mrb[0].mxu0
      %2716 = vmatprep.mubr.f32.mxu0 0.0
      %v2717 = vand.u32 %v1627, 4294901760
      %2718 = vmatmul.mubr.f32.gmra.mrb[0].mxu0 %v2717
      %v2719 = vpop.f32.mrb[0].mxu0
      %v2720 = vadd.f32 %v2555, %v2719
      %v2721 = vpop.f32.mrb[0].mxu0
      %2722 = vmatprep.mubr.f32.mxu0 0.0
      %v2723 = vand.u32 %v1630, 4294901760
      %2724 = vmatmul.mubr.f32.gmra.mrb[0].mxu0 %v2723
      %v2725 = vpop.f32.mrb[0].mxu0
      %v2726 = vadd.f32 %v2561, %v2725
      %v2727 = vpop.f32.mrb[0].mxu0
      %2728 = vmatprep.mubr.f32.mxu0 0.0
      %v2729 = vand.u32 %v1633, 4294901760
      %2730 = vmatmul.mubr.f32.gmra.mrb[0].mxu0 %v2729
      %v2731 = vpop.f32.mrb[0].mxu0
      %v2732 = vadd.f32 %v2567, %v2731
      %v2733 = vpop.f32.mrb[0].mxu0
      %2734 = vmatprep.mubr.f32.mxu0 0.0
      %v2735 = vand.u32 %v1636, 4294901760
      %2736 = vmatmul.mubr.f32.gmra.mrb[0].mxu0 %v2735
      %v2737 = vpop.f32.mrb[0].mxu0
      %v2738 = vadd.f32 %v2573, %v2737
      %v2739 = vpop.f32.mrb[0].mxu0
      %2740 = vmatprep.mubr.f32.mxu0 0.0
      %v2741 = vand.u32 %v1639, 4294901760
      %2742 = vmatmul.mubr.f32.gmra.mrb[0].mxu0 %v2741
      %v2743 = vpop.f32.mrb[0].mxu0
      %v2744 = vadd.f32 %v2579, %v2743
      %v2745 = vpop.f32.mrb[0].mxu0
      %2746 = vmatprep.mubr.f32.mxu0 0.0
      %v2747 = vand.u32 %v1642, 4294901760
      %2748 = vmatmul.mubr.f32.gmra.mrb[0].mxu0 %v2747
      %v2749 = vpop.f32.mrb[0].mxu0
      %v2750 = vadd.f32 %v2585, %v2749
      %v2751 = vpop.f32.mrb[0].mxu0
      %2752 = vmatprep.mubr.f32.mxu0 0.0
      %v2753 = vand.u32 %v1645, 4294901760
      %2754 = vmatmul.mubr.f32.gmra.mrb[0].mxu0 %v2753
      %v2755 = vpop.f32.mrb[0].mxu0
      %v2756 = vadd.f32 %v2591, %v2755
      %v2757 = vpop.f32.mrb[0].mxu0
      %2758 = vmatprep.mubr.f32.mxu0 0.0
      %v2759 = vand.u32 %v1648, 4294901760
      %2760 = vmatmul.mubr.f32.gmra.mrb[0].mxu0 %v2759
      %v2761 = vpop.f32.mrb[0].mxu0
      %v2762 = vadd.f32 %v2597, %v2761
      %v2763 = vpop.f32.mrb[0].mxu0
      %2764 = vmatprep.mubr.f32.mxu0 0.0
      %v2765 = vand.u32 %v1651, 4294901760
      %2766 = vmatmul.mubr.f32.gmra.mrb[0].mxu0 %v2765
      %v2767 = vpop.f32.mrb[0].mxu0
      %v2768 = vadd.f32 %v2603, %v2767
      %v2769 = vpop.f32.mrb[0].mxu0
      %2770 = vmatprep.mubr.f32.mxu0 0.0
      %v2771 = vand.u32 %v1654, 4294901760
      %2772 = vmatmul.mubr.f32.gmra.mrb[0].mxu0 %v2771
      %v2773 = vpop.f32.mrb[0].mxu0
      %v2774 = vadd.f32 %v2609, %v2773
      %v2775 = vpop.f32.mrb[0].mxu0
      %2776 = vmatprep.mubr.f32.mxu0 0.0
      %v2777 = vand.u32 %v1657, 4294901760
      %2778 = vmatmul.mubr.f32.gmra.mrb[0].mxu0 %v2777
      %v2779 = vpop.f32.mrb[0].mxu0
      %v2780 = vadd.f32 %v2615, %v2779
      %v2781 = vpop.f32.mrb[0].mxu0
      %2782 = vmatprep.mubr.f32.mxu0 0.0
      %v2783 = vand.u32 %v1660, 4294901760
      %2784 = vmatmul.mubr.f32.gmra.mrb[0].mxu0 %v2783
      %v2785 = vpop.f32.mrb[0].mxu0
      %v2786 = vadd.f32 %v2621, %v2785
      %v2787 = vpop.f32.mrb[0].mxu0
      %2788 = vmatprep.mubr.f32.mxu0 0.0
      %v2789 = vand.u32 %v1663, 4294901760
      %2790 = vmatmul.mubr.f32.gmra.mrb[0].mxu0 %v2789
      %v2791 = vpop.f32.mrb[0].mxu0
      %v2792 = vadd.f32 %v2627, %v2791
      %v2793 = vpop.f32.mrb[0].mxu0
      %2794 = vdwg.mxu0
      %v2795 = vmax.f32 %v2702, 0.0
      %v2796 = vmax.f32 %v2708, 0.0
      %v2797 = vmax.f32 %v2714, 0.0
      %v2798 = vmax.f32 %v2720, 0.0
      %v2799 = vmax.f32 %v2726, 0.0
      %v2800 = vmax.f32 %v2732, 0.0
      %v2801 = vmax.f32 %v2738, 0.0
      %v2802 = vmax.f32 %v2744, 0.0
      %v2803 = vmax.f32 %v2750, 0.0
      %v2804 = vmax.f32 %v2756, 0.0
      %v2805 = vmax.f32 %v2762, 0.0
      %v2806 = vmax.f32 %v2768, 0.0
      %v2807 = vmax.f32 %v2774, 0.0
      %v2808 = vmax.f32 %v2780, 0.0
      %v2809 = vmax.f32 %v2786, 0.0
      %v2810 = vmax.f32 %v2792, 0.0
      %s2811 = scalar_lea.vmem %s1, 120
      %v2812 = vld [vmem:[%s2811] sm:$0x1]
      %v2813 = vlaneseq
      %v2814 = vshrl.u32 %v2813, 7
      %v2815 = vsub.s32 0, %v2814
      %v2816 = vrot.slane %v2812, %v2815
      %v2817 = vmul.f32 %v2795, %v2816
      %v2818 = vmul.f32 %v2796, %v2816
      %v2819 = vmul.f32 %v2797, %v2816
      %v2820 = vmul.f32 %v2798, %v2816
      %v2821 = vmul.f32 %v2799, %v2816
      %v2822 = vmul.f32 %v2800, %v2816
      %v2823 = vmul.f32 %v2801, %v2816
      %v2824 = vmul.f32 %v2802, %v2816
      %v2825 = vmul.f32 %v2803, %v2816
      %v2826 = vmul.f32 %v2804, %v2816
      %v2827 = vmul.f32 %v2805, %v2816
      %v2828 = vmul.f32 %v2806, %v2816
      %v2829 = vmul.f32 %v2807, %v2816
      %v2830 = vmul.f32 %v2808, %v2816
      %v2831 = vmul.f32 %v2809, %v2816
      %v2832 = vmul.f32 %v2810, %v2816
      %2833 = vadd.xlane.f32.xlu0 %v2817
      %v2834 = vpop.xlane.xlu0 %2833
      %2835 = vadd.xlane.f32.xlu0 %v2818
      %v2836 = vpop.xlane.xlu0 %2835
      %2837 = vadd.xlane.f32.xlu0 %v2819
      %v2838 = vpop.xlane.xlu0 %2837
      %2839 = vadd.xlane.f32.xlu0 %v2820
      %v2840 = vpop.xlane.xlu0 %2839
      %2841 = vadd.xlane.f32.xlu0 %v2821
      %v2842 = vpop.xlane.xlu0 %2841
      %2843 = vadd.xlane.f32.xlu0 %v2822
      %v2844 = vpop.xlane.xlu0 %2843
      %2845 = vadd.xlane.f32.xlu0 %v2823
      %v2846 = vpop.xlane.xlu0 %2845
      %2847 = vadd.xlane.f32.xlu0 %v2824
      %v2848 = vpop.xlane.xlu0 %2847
      %2849 = vadd.xlane.f32.xlu0 %v2825
      %v2850 = vpop.xlane.xlu0 %2849
      %2851 = vadd.xlane.f32.xlu0 %v2826
      %v2852 = vpop.xlane.xlu0 %2851
      %2853 = vadd.xlane.f32.xlu0 %v2827
      %v2854 = vpop.xlane.xlu0 %2853
      %2855 = vadd.xlane.f32.xlu0 %v2828
      %v2856 = vpop.xlane.xlu0 %2855
      %2857 = vadd.xlane.f32.xlu0 %v2829
      %v2858 = vpop.xlane.xlu0 %2857
      %2859 = vadd.xlane.f32.xlu0 %v2830
      %v2860 = vpop.xlane.xlu0 %2859
      %2861 = vadd.xlane.f32.xlu0 %v2831
      %v2862 = vpop.xlane.xlu0 %2861
      %2863 = vadd.xlane.f32.xlu0 %v2832
      %v2864 = vpop.xlane.xlu0 %2863
      %v2865 = vld [vmem:[%s2811 + $0x20] sm:$0x1]
      %v2866 = vlaneseq
      %v2867 = vshrl.u32 %v2866, 7
      %v2868 = vsub.s32 0, %v2867
      %v2869 = vrot.slane %v2865, %v2868
      %v2870 = vadd.f32 %v2834, %v2869
      %v2871 = vadd.f32 %v2836, %v2869
      %v2872 = vadd.f32 %v2838, %v2869
      %v2873 = vadd.f32 %v2840, %v2869
      %v2874 = vadd.f32 %v2842, %v2869
      %v2875 = vadd.f32 %v2844, %v2869
      %v2876 = vadd.f32 %v2846, %v2869
      %v2877 = vadd.f32 %v2848, %v2869
      %v2878 = vadd.f32 %v2850, %v2869
      %v2879 = vadd.f32 %v2852, %v2869
      %v2880 = vadd.f32 %v2854, %v2869
      %v2881 = vadd.f32 %v2856, %v2869
      %v2882 = vadd.f32 %v2858, %v2869
      %v2883 = vadd.f32 %v2860, %v2869
      %v2884 = vadd.f32 %v2862, %v2869
      %v2885 = vadd.f32 %v2864, %v2869
      %v2886 = vtanh.pop %v2870
      %v2887 = vtanh.pop %v2871
      %v2888 = vtanh.pop %v2872
      %v2889 = vtanh.pop %v2873
      %v2890 = vtanh.pop %v2874
      %v2891 = vtanh.pop %v2875
      %v2892 = vtanh.pop %v2876
      %v2893 = vtanh.pop %v2877
      %v2894 = vtanh.pop %v2878
      %v2895 = vtanh.pop %v2879
      %v2896 = vtanh.pop %v2880
      %v2897 = vtanh.pop %v2881
      %v2898 = vtanh.pop %v2882
      %v2899 = vtanh.pop %v2883
      %v2900 = vtanh.pop %v2884
      %v2901 = vtanh.pop %v2885
      %2902 = vst [vmem:[%s145] sm:$0xff] %v2886
      %2903 = vst [vmem:[%s145 + $0x8] sm:$0xff] %v2887
      %2904 = vst [vmem:[%s145 + $0x10] sm:$0xff] %v2888
      %2905 = vst [vmem:[%s145 + $0x18] sm:$0xff] %v2889
      %2906 = vst [vmem:[%s145 + $0x20] sm:$0xff] %v2890
      %2907 = vst [vmem:[%s145 + $0x28] sm:$0xff] %v2891
      %2908 = vst [vmem:[%s145 + $0x30] sm:$0xff] %v2892
      %2909 = vst [vmem:[%s145 + $0x38] sm:$0xff] %v2893
      %2910 = vst [vmem:[%s145 + $0x40] sm:$0xff] %v2894
      %2911 = vst [vmem:[%s145 + $0x48] sm:$0xff] %v2895
      %2912 = vst [vmem:[%s145 + $0x50] sm:$0xff] %v2896
      %2913 = vst [vmem:[%s145 + $0x58] sm:$0xff] %v2897
      %2914 = vst [vmem:[%s145 + $0x60] sm:$0xff] %v2898
      %2915 = vst [vmem:[%s145 + $0x68] sm:$0xff] %v2899
      %2916 = vst [vmem:[%s145 + $0x70] sm:$0xff] %v2900
      %2917 = vst [vmem:[%s145 + $0x78] sm:$0xff] %v2901
      %s2918 = smul.u32 16, %s13
      %p2919 = scmp.lt.s32.totalorder %s2918, 31
      %s2920 = scalar_select %p2919, %s2918, 31
      %s2921 = smul.addr %s2920, 8
      %s2922 = scalar_lea.vmem %s2, %s2921
      // Predicated region
      $region29: #{actor_forward.1} parent=27 // pred_check
        %p2923 = pneg %p78
      $region30: #{actor_forward.1} parent=27 // pred_check_branch
        %2925 = sbr.rel (%p2923) target = $region32
      $region31: #{actor_forward.1} parent=27 // pred_region
        %s2926 = smul.u32 16, %s13
      $region32: #{actor_forward.1} parent=27 // pred_fallthru
        _
    $region28: #{actor_forward.1} parent=5 // pred_fallthru
      _
    %p2927 = scmp.le.s32.totalorder 2, %s8
    // Predicated region
    $region33: #{actor_forward.1} parent=5 // pred_check
      %p2928 = pneg %p2927
    $region34: #{actor_forward.1} parent=5 // pred_check_branch
      %2930 = sbr.rel (%p2928) target = $region36
    $region35: #{actor_forward.1} parent=5 // pred_region
      %s2931 = ssub.s32 %s8, 2
      // Predicated region
      $region37: #{actor_forward.1} parent=35 // pred_check
        %p2932 = pneg %p84
      $region38: #{actor_forward.1} parent=35 // pred_check_branch
        %2934 = sbr.rel (%p2932) target = $region40
      $region39: #{actor_forward.1} parent=35 // pred_region
        %s2935 = smul.u32 16, %s14
        %p2936 = scmp.lt.s32.totalorder %s2935, 31
        %s2937 = scalar_select %p2936, %s2935, 31
        %s2938 = smul.addr %s2937, 8
        %s2939 = scalar_lea.vmem %s2, %s2938
      $region40: #{actor_forward.1} parent=35 // pred_fallthru
        _
    $region36: #{actor_forward.1} parent=5 // pred_fallthru
      _
  $region6: #{actor_forward.1} parent=0 // loop_footer
    %s12 = sadd.s32 1, %s8
  $region7: #{actor_forward.1} parent=0 // loop_footer_branch
    %7 = sbr.rel target = $region3
  $region8: #{actor_forward.1} parent=0 // loop_exit
    _

</llo_original>
